<compile_context>
chip_gen: v6e
topology: v6e:2x2x1
jax: 0.10.0
libtpu: 0.0.40
codegen_flags: <defaults>
</compile_context>

<pallas_src>
import math
import functools

import jax
import jax.numpy as jnp
from jax.experimental import pallas as pl
from jax.experimental.pallas import tpu as pltpu


def _lin_angular_kernel(x_ref, wq_ref, wk_ref, wv_ref, wproj_ref, bproj_ref,
                        mask_ref, hmask_ref, toep_ref, o_ref,
                        *, num_heads, batch, seq_len):
    # x_ref: (B*L, C) bf16      wq/wk/wv/wproj: (C, C) bf16     bproj: (1, C) f32
    # mask_ref: (C, C) f32 block-diagonal ones   hmask_ref: (heads, C) f32
    # toep_ref: (heads, L, L) bf16 banded conv matrices          o_ref: (B*L, C) f32
    C = x_ref.shape[1]
    inv_pi = 1.0 / math.pi

    x = x_ref[...]                                                   # (B*L, C) bf16
    # Lane-aligned q/k/v projections over the full token slab (fp32 MXU accumulation).
    q = jnp.dot(x, wq_ref[...], preferred_element_type=jnp.float32)  # (B*L, C) f32
    k = jnp.dot(x, wk_ref[...], preferred_element_type=jnp.float32)
    v = jnp.dot(x, wv_ref[...], preferred_element_type=jnp.float32)

    m = mask_ref[...]                                                # (C, C) f32
    hmask = hmask_ref[...]                                           # (heads, C) f32
    toep = toep_ref[...]                                             # (heads, L, L) bf16

    # Per-head L2 normalize: (x*x) @ M broadcasts the per-head sum of squares to every
    # column of that head; rsqrt runs on the EUP slot.
    qn = q * jax.lax.rsqrt(jnp.dot(q * q, m, preferred_element_type=jnp.float32))
    kn = k * jax.lax.rsqrt(jnp.dot(k * k, m, preferred_element_type=jnp.float32))

    qn16 = qn.astype(jnp.bfloat16)
    kn16 = kn.astype(jnp.bfloat16)
    v16 = v.astype(jnp.bfloat16)
    wproj = wproj_ref[...]                                           # (C, C) bf16
    bproj = bproj_ref[...]                                           # (1, C) f32

    # Per-batch attention core (the k^T v state is per batch element). B is tiny and
    # static; all row offsets are sublane-aligned multiples of L.
    for b in range(batch):
        lo = b * seq_len
        qb = qn16[lo:lo + seq_len]
        kb = kn16[lo:lo + seq_len]
        vb16 = v16[lo:lo + seq_len]
        vb = v[lo:lo + seq_len]

        # attn = k^T v over tokens for all heads at once; zero the cross-head blocks.
        attn = jax.lax.dot_general(kb, vb16, (((0,), (0,)), ((), ())),
                                   preferred_element_type=jnp.float32)   # (C, C)
        attn16 = (attn * m).astype(jnp.bfloat16)

        # out = 0.5*v + (1/pi) * q @ attn, then per-head L2 normalize.
        out = 0.5 * vb + inv_pi * jnp.dot(qb, attn16,
                                          preferred_element_type=jnp.float32)
        out = out * jax.lax.rsqrt(jnp.dot(out * out, m,
                                          preferred_element_type=jnp.float32))

        # Depthwise conv over tokens: per-head banded Toeplitz matmul, selected per
        # output column with the head mask (no pad/concat, no shifted slices).
        dcv = jnp.zeros((seq_len, C), jnp.float32)
        for h in range(num_heads):
            tv = jnp.dot(toep[h], vb16, preferred_element_type=jnp.float32)  # (L, C)
            dcv = dcv + tv * hmask[h:h + 1, :]
        out = out + dcv

        # Output projection (+bias), stored straight into the aligned row window.
        yb = jnp.dot(out.astype(jnp.bfloat16), wproj,
                     preferred_element_type=jnp.float32) + bproj
        o_ref[lo:lo + seq_len, :] = yb


def lin_angular_attention(x_nchw, params, *, num_heads=2, res_kernel_size=9):
    B, C, H, W = x_nchw.shape
    L = H * W
    head_dim = C // num_heads
    pad = res_kernel_size // 2

    # NCHW -> token-major (B*L, C) slab (mirrors torch permute(0,2,3,1).view(N,L,C)).
    x_flat = jnp.transpose(x_nchw, (0, 2, 3, 1)).reshape(B * L, C).astype(jnp.bfloat16)

    # Split the qkv weight into three lane-aligned (C, C) matrices.
    wqkv = params["wqkv"].astype(jnp.float32)              # (C, 3C), head-major cols
    wq = wqkv[:, 0:C].astype(jnp.bfloat16)
    wk = wqkv[:, C:2 * C].astype(jnp.bfloat16)
    wv = wqkv[:, 2 * C:3 * C].astype(jnp.bfloat16)
    wproj = params["wproj"].astype(jnp.bfloat16)           # (C, C)
    bproj = params["bproj"].reshape(1, C).astype(jnp.float32)

    # Static block-diagonal head masks.
    cols = jnp.arange(C)
    blk_mask = (cols[:, None] // head_dim == cols[None, :] // head_dim).astype(jnp.float32)
    head_mask = (jnp.arange(num_heads)[:, None] == cols[None, :] // head_dim).astype(jnp.float32)

    # Depthwise conv (kernel (K,1), zero padding K//2, groups=heads) as per-head banded
    # Toeplitz matrices: T[h, i, j] = w[h, j - i + pad] when 0 <= j - i + pad < K.
    w = params["dconv_w"].astype(jnp.float32)               # (heads, K)
    ii = jnp.arange(L)[:, None]
    jj = jnp.arange(L)[None, :]
    tap = jj - ii + pad
    valid = ((tap >= 0) & (tap < res_kernel_size)).astype(jnp.float32)
    toep = (w[:, jnp.clip(tap, 0, res_kernel_size - 1)] * valid[None]).astype(jnp.bfloat16)

    kernel = functools.partial(_lin_angular_kernel,
                               num_heads=num_heads, batch=B, seq_len=L)

    out_flat = pl.pallas_call(
        kernel,
        out_shape=jax.ShapeDtypeStruct((B * L, C), jnp.float32),
        grid=(1,),
        in_specs=[
            pl.BlockSpec((B * L, C), lambda i: (0, 0)),            # x slab
            pl.BlockSpec((C, C), lambda i: (0, 0)),                # wq
            pl.BlockSpec((C, C), lambda i: (0, 0)),                # wk
            pl.BlockSpec((C, C), lambda i: (0, 0)),                # wv
            pl.BlockSpec((C, C), lambda i: (0, 0)),                # wproj
            pl.BlockSpec((1, C), lambda i: (0, 0)),                # bproj
            pl.BlockSpec((C, C), lambda i: (0, 0)),                # block-diag mask
            pl.BlockSpec((num_heads, C), lambda i: (0, 0)),        # head column mask
            pl.BlockSpec((num_heads, L, L), lambda i: (0, 0, 0)),  # Toeplitz conv
        ],
        out_specs=pl.BlockSpec((B * L, C), lambda i: (0, 0)),
        compiler_params=pltpu.CompilerParams(dimension_semantics=("arbitrary",)),
    )(x_flat, wq, wk, wv, wproj, bproj, blk_mask, head_mask, toep)

    # (B*L, C) -> (B, L, C) -> (B, C, L) -> (B, C, H, W)
    return jnp.transpose(out_flat.reshape(B, L, C), (0, 2, 1)).reshape(B, C, H, W)


def reference(x_nchw, params, *, num_heads=2, res_kernel_size=9):
    """Pure-JAX fp32 reference mirroring the PyTorch forward (sparse_reg=False)."""
    B, C, H, W = x_nchw.shape
    L = H * W
    hd = C // num_heads
    pad = res_kernel_size // 2

    x = jnp.transpose(x_nchw, (0, 2, 3, 1)).reshape(B, L, C)
    qkv = x @ params["wqkv"]
    qkv = qkv.reshape(B, L, 3, num_heads, hd).transpose(2, 0, 3, 1, 4)
    q, k, v = qkv[0], qkv[1], qkv[2]  # (B, heads, L, hd)

    q = q / jnp.linalg.norm(q, axis=-1, keepdims=True)
    k = k / jnp.linalg.norm(k, axis=-1, keepdims=True)

    w = params["dconv_w"]  # (heads, K)
    vp = jnp.pad(v, ((0, 0), (0, 0), (pad, pad), (0, 0)))
    dconv_v = sum(w[:, t][None, :, None, None] * vp[:, :, t:t + L, :]
                  for t in range(res_kernel_size))

    attn = jnp.einsum('bhld,bhle->bhde', k, v)
    out = 0.5 * v + (1.0 / math.pi) * jnp.einsum('bhld,bhde->bhle', q, attn)
    out = out / jnp.linalg.norm(out, axis=-1, keepdims=True)
    out = out + dconv_v
    out = jnp.transpose(out, (0, 2, 1, 3)).reshape(B, L, C)
    out = out @ params["wproj"] + params["bproj"]
    return jnp.transpose(out, (0, 2, 1)).reshape(B, C, H, W)


if __name__ == "__main__":
    # Small shapes consistent with the module: B=2, C=32 channels, 8x8 spatial,
    # num_heads=2 -> head_dim=16, L=64, res_kernel_size=9.
    B, C, H, W = 2, 32, 8, 8
    num_heads = 2
    K = 9

    key = jax.random.PRNGKey(0)
    k1, k2, k3, k4, k5 = jax.random.split(key, 5)

    params = {
        # nn.Linear(C, 3C, bias=False): torch weight (3C, C) stored transposed (C, 3C)
        "wqkv": jax.random.normal(k1, (C, 3 * C), jnp.float32) * (1.0 / math.sqrt(C)),
        # nn.Linear(C, C): weight (C, C) transposed + bias (C,)
        "wproj": jax.random.normal(k2, (C, C), jnp.float32) * (1.0 / math.sqrt(C)),
        "bproj": jax.random.normal(k3, (C,), jnp.float32) * 0.01,
        # nn.Conv2d(heads, heads, (K,1), groups=heads, bias=False): (heads,1,K,1) -> (heads, K)
        "dconv_w": jax.random.normal(k4, (num_heads, K), jnp.float32) * (1.0 / K),
    }

    x = jax.random.normal(k5, (B, C, H, W), jnp.float32)

    y = lin_angular_attention(x, params, num_heads=num_heads, res_kernel_size=K)
    y = jax.block_until_ready(y)

    y_ref = reference(x, params, num_heads=num_heads, res_kernel_size=K)
    assert y.shape == (B, C, H, W)
    # bf16 MXU operands with fp32 accumulation -> ~1e-2 worst-case deviation vs fp32 ref.
    assert jnp.allclose(y, y_ref, atol=4e-2, rtol=4e-2), float(jnp.max(jnp.abs(y - y_ref)))

    print("KERNEL_OK")
</pallas_src>

<mosaic_0001>
module attributes {stable_mosaic.version = 11 : i64} {
  func.func @_lin_angular_kernel(%arg0: i32, %arg1: memref<128x32xbf16, #tpu.memory_space<vmem>>, %arg2: memref<32x32xbf16, #tpu.memory_space<vmem>>, %arg3: memref<32x32xbf16, #tpu.memory_space<vmem>>, %arg4: memref<32x32xbf16, #tpu.memory_space<vmem>>, %arg5: memref<32x32xbf16, #tpu.memory_space<vmem>>, %arg6: memref<1x32xf32, #tpu.memory_space<vmem>>, %arg7: memref<32x32xf32, #tpu.memory_space<vmem>>, %arg8: memref<2x32xf32, #tpu.memory_space<vmem>>, %arg9: memref<2x64x64xbf16, #tpu.memory_space<vmem>>, %arg10: memref<128x32xf32, #tpu.memory_space<vmem>>) attributes {dimension_semantics = [#tpu.dimension_semantics<arbitrary>], iteration_bounds = array<i64: 1>, scalar_prefetch = 0 : i64, scratch_operands = 0 : i64, tpu.core_type = #tpu.core_type<tc>, window_params = [{pipeline_mode = #tpu.pipeline_mode<synchronous>, transform_indices = @transform_0, window_bounds = array<i64: 128, 32>}, {pipeline_mode = #tpu.pipeline_mode<synchronous>, transform_indices = @transform_1, window_bounds = array<i64: 32, 32>}, {pipeline_mode = #tpu.pipeline_mode<synchronous>, transform_indices = @transform_2, window_bounds = array<i64: 32, 32>}, {pipeline_mode = #tpu.pipeline_mode<synchronous>, transform_indices = @transform_3, window_bounds = array<i64: 32, 32>}, {pipeline_mode = #tpu.pipeline_mode<synchronous>, transform_indices = @transform_4, window_bounds = array<i64: 32, 32>}, {pipeline_mode = #tpu.pipeline_mode<synchronous>, transform_indices = @transform_5, window_bounds = array<i64: 1, 32>}, {pipeline_mode = #tpu.pipeline_mode<synchronous>, transform_indices = @transform_6, window_bounds = array<i64: 32, 32>}, {pipeline_mode = #tpu.pipeline_mode<synchronous>, transform_indices = @transform_7, window_bounds = array<i64: 2, 32>}, {pipeline_mode = #tpu.pipeline_mode<synchronous>, transform_indices = @transform_8, window_bounds = array<i64: 2, 64, 64>}, {pipeline_mode = #tpu.pipeline_mode<synchronous>, transform_indices = @transform_9, window_bounds = array<i64: 128, 32>}]} {
    %c0 = arith.constant 0 : index
    %c0_0 = arith.constant 0 : index
    %0 = vector.load %arg1[%c0, %c0_0] : memref<128x32xbf16, #tpu.memory_space<vmem>>, vector<128x32xbf16>
    %c0_1 = arith.constant 0 : index
    %c0_2 = arith.constant 0 : index
    %1 = vector.load %arg2[%c0_1, %c0_2] : memref<32x32xbf16, #tpu.memory_space<vmem>>, vector<32x32xbf16>
    %cst = arith.constant dense<0.000000e+00> : vector<128x32xf32>
    %2 = tpu.matmul %0, %1, %cst {dimension_numbers = #tpu.dot_dimension_numbers<[1], [0], [0], [1], [0, 0, 1, 1], [], []>} : vector<128x32xbf16>, vector<32x32xbf16>, vector<128x32xf32> -> vector<128x32xf32>
    %c0_3 = arith.constant 0 : index
    %c0_4 = arith.constant 0 : index
    %3 = vector.load %arg3[%c0_3, %c0_4] : memref<32x32xbf16, #tpu.memory_space<vmem>>, vector<32x32xbf16>
    %cst_5 = arith.constant dense<0.000000e+00> : vector<128x32xf32>
    %4 = tpu.matmul %0, %3, %cst_5 {dimension_numbers = #tpu.dot_dimension_numbers<[1], [0], [0], [1], [0, 0, 1, 1], [], []>} : vector<128x32xbf16>, vector<32x32xbf16>, vector<128x32xf32> -> vector<128x32xf32>
    %c0_6 = arith.constant 0 : index
    %c0_7 = arith.constant 0 : index
    %5 = vector.load %arg4[%c0_6, %c0_7] : memref<32x32xbf16, #tpu.memory_space<vmem>>, vector<32x32xbf16>
    %cst_8 = arith.constant dense<0.000000e+00> : vector<128x32xf32>
    %6 = tpu.matmul %0, %5, %cst_8 {dimension_numbers = #tpu.dot_dimension_numbers<[1], [0], [0], [1], [0, 0, 1, 1], [], []>} : vector<128x32xbf16>, vector<32x32xbf16>, vector<128x32xf32> -> vector<128x32xf32>
    %c0_9 = arith.constant 0 : index
    %c0_10 = arith.constant 0 : index
    %7 = vector.load %arg7[%c0_9, %c0_10] : memref<32x32xf32, #tpu.memory_space<vmem>>, vector<32x32xf32>
    %c0_11 = arith.constant 0 : index
    %c0_12 = arith.constant 0 : index
    %8 = vector.load %arg8[%c0_11, %c0_12] : memref<2x32xf32, #tpu.memory_space<vmem>>, vector<2x32xf32>
    %c0_13 = arith.constant 0 : index
    %c0_14 = arith.constant 0 : index
    %c0_15 = arith.constant 0 : index
    %9 = vector.load %arg9[%c0_13, %c0_14, %c0_15] : memref<2x64x64xbf16, #tpu.memory_space<vmem>>, vector<2x64x64xbf16>
    %10 = arith.mulf %2, %2 : vector<128x32xf32>
    %cst_16 = arith.constant dense<0.000000e+00> : vector<128x32xf32>
    %11 = tpu.matmul %10, %7, %cst_16 {dimension_numbers = #tpu.dot_dimension_numbers<[1], [0], [0], [1], [0, 0, 1, 1], [], []>} : vector<128x32xf32>, vector<32x32xf32>, vector<128x32xf32> -> vector<128x32xf32>
    %12 = math.rsqrt %11 : vector<128x32xf32>
    %13 = arith.mulf %2, %12 : vector<128x32xf32>
    %14 = arith.mulf %4, %4 : vector<128x32xf32>
    %cst_17 = arith.constant dense<0.000000e+00> : vector<128x32xf32>
    %15 = tpu.matmul %14, %7, %cst_17 {dimension_numbers = #tpu.dot_dimension_numbers<[1], [0], [0], [1], [0, 0, 1, 1], [], []>} : vector<128x32xf32>, vector<32x32xf32>, vector<128x32xf32> -> vector<128x32xf32>
    %16 = math.rsqrt %15 : vector<128x32xf32>
    %17 = arith.mulf %4, %16 : vector<128x32xf32>
    %18 = arith.truncf %13 : vector<128x32xf32> to vector<128x32xbf16>
    %19 = arith.truncf %17 : vector<128x32xf32> to vector<128x32xbf16>
    %20 = arith.truncf %6 : vector<128x32xf32> to vector<128x32xbf16>
    %c0_18 = arith.constant 0 : index
    %c0_19 = arith.constant 0 : index
    %21 = vector.load %arg5[%c0_18, %c0_19] : memref<32x32xbf16, #tpu.memory_space<vmem>>, vector<32x32xbf16>
    %c0_20 = arith.constant 0 : index
    %c0_21 = arith.constant 0 : index
    %22 = vector.load %arg6[%c0_20, %c0_21] : memref<1x32xf32, #tpu.memory_space<vmem>>, vector<1x32xf32>
    %23 = vector.extract_strided_slice %18 {offsets = [0, 0], sizes = [64, 32], strides = [1, 1]} : vector<128x32xbf16> to vector<64x32xbf16>
    %24 = vector.extract_strided_slice %19 {offsets = [0, 0], sizes = [64, 32], strides = [1, 1]} : vector<128x32xbf16> to vector<64x32xbf16>
    %25 = vector.extract_strided_slice %20 {offsets = [0, 0], sizes = [64, 32], strides = [1, 1]} : vector<128x32xbf16> to vector<64x32xbf16>
    %26 = vector.extract_strided_slice %6 {offsets = [0, 0], sizes = [64, 32], strides = [1, 1]} : vector<128x32xf32> to vector<64x32xf32>
    %cst_22 = arith.constant dense<0.000000e+00> : vector<32x32xf32>
    %27 = tpu.matmul %24, %25, %cst_22 {dimension_numbers = #tpu.dot_dimension_numbers<[0], [0], [1], [1], [0, 1, 1, 1], [], []>} : vector<64x32xbf16>, vector<64x32xbf16>, vector<32x32xf32> -> vector<32x32xf32>
    %28 = arith.mulf %27, %7 : vector<32x32xf32>
    %29 = arith.truncf %28 : vector<32x32xf32> to vector<32x32xbf16>
    %cst_23 = arith.constant 5.000000e-01 : f32
    %30 = vector.broadcast %cst_23 : f32 to vector<64x32xf32>
    %31 = arith.mulf %30, %26 : vector<64x32xf32>
    %cst_24 = arith.constant dense<0.000000e+00> : vector<64x32xf32>
    %32 = tpu.matmul %23, %29, %cst_24 {dimension_numbers = #tpu.dot_dimension_numbers<[1], [0], [0], [1], [0, 0, 1, 1], [], []>} : vector<64x32xbf16>, vector<32x32xbf16>, vector<64x32xf32> -> vector<64x32xf32>
    %cst_25 = arith.constant 0.318309873 : f32
    %33 = vector.broadcast %cst_25 : f32 to vector<64x32xf32>
    %34 = arith.mulf %33, %32 : vector<64x32xf32>
    %35 = arith.addf %31, %34 : vector<64x32xf32>
    %36 = arith.mulf %35, %35 : vector<64x32xf32>
    %cst_26 = arith.constant dense<0.000000e+00> : vector<64x32xf32>
    %37 = tpu.matmul %36, %7, %cst_26 {dimension_numbers = #tpu.dot_dimension_numbers<[1], [0], [0], [1], [0, 0, 1, 1], [], []>} : vector<64x32xf32>, vector<32x32xf32>, vector<64x32xf32> -> vector<64x32xf32>
    %38 = math.rsqrt %37 : vector<64x32xf32>
    %39 = arith.mulf %35, %38 : vector<64x32xf32>
    %cst_27 = arith.constant 0.000000e+00 : f32
    %40 = vector.broadcast %cst_27 : f32 to vector<64x32xf32>
    %41 = vector.extract_strided_slice %9 {offsets = [0, 0, 0], sizes = [1, 64, 64], strides = [1, 1, 1]} : vector<2x64x64xbf16> to vector<1x64x64xbf16>
    %42 = vector.shape_cast %41 : vector<1x64x64xbf16> to vector<64x64xbf16>
    %cst_28 = arith.constant dense<0.000000e+00> : vector<64x32xf32>
    %43 = tpu.matmul %42, %25, %cst_28 {dimension_numbers = #tpu.dot_dimension_numbers<[1], [0], [0], [1], [0, 0, 1, 1], [], []>} : vector<64x64xbf16>, vector<64x32xbf16>, vector<64x32xf32> -> vector<64x32xf32>
    %44 = vector.extract_strided_slice %8 {offsets = [0, 0], sizes = [1, 32], strides = [1, 1]} : vector<2x32xf32> to vector<1x32xf32>
    %45 = vector.broadcast %44 : vector<1x32xf32> to vector<64x32xf32>
    %46 = arith.mulf %43, %45 : vector<64x32xf32>
    %47 = arith.addf %40, %46 : vector<64x32xf32>
    %48 = vector.extract_strided_slice %9 {offsets = [1, 0, 0], sizes = [1, 64, 64], strides = [1, 1, 1]} : vector<2x64x64xbf16> to vector<1x64x64xbf16>
    %49 = vector.shape_cast %48 : vector<1x64x64xbf16> to vector<64x64xbf16>
    %cst_29 = arith.constant dense<0.000000e+00> : vector<64x32xf32>
    %50 = tpu.matmul %49, %25, %cst_29 {dimension_numbers = #tpu.dot_dimension_numbers<[1], [0], [0], [1], [0, 0, 1, 1], [], []>} : vector<64x64xbf16>, vector<64x32xbf16>, vector<64x32xf32> -> vector<64x32xf32>
    %51 = vector.extract_strided_slice %8 {offsets = [1, 0], sizes = [1, 32], strides = [1, 1]} : vector<2x32xf32> to vector<1x32xf32>
    %52 = vector.broadcast %51 : vector<1x32xf32> to vector<64x32xf32>
    %53 = arith.mulf %50, %52 : vector<64x32xf32>
    %54 = arith.addf %47, %53 : vector<64x32xf32>
    %55 = arith.addf %39, %54 : vector<64x32xf32>
    %56 = arith.truncf %55 : vector<64x32xf32> to vector<64x32xbf16>
    %cst_30 = arith.constant dense<0.000000e+00> : vector<64x32xf32>
    %57 = tpu.matmul %56, %21, %cst_30 {dimension_numbers = #tpu.dot_dimension_numbers<[1], [0], [0], [1], [0, 0, 1, 1], [], []>} : vector<64x32xbf16>, vector<32x32xbf16>, vector<64x32xf32> -> vector<64x32xf32>
    %58 = vector.broadcast %22 : vector<1x32xf32> to vector<64x32xf32>
    %59 = arith.addf %57, %58 : vector<64x32xf32>
    %c0_31 = arith.constant 0 : index
    %c0_32 = arith.constant 0 : index
    %60 = vector.load %arg10[%c0_31, %c0_32] : memref<128x32xf32, #tpu.memory_space<vmem>>, vector<64x32xf32>
    tpu.vector_store %arg10[%c0_31, %c0_32], %59 {strides = array<i32>} : memref<128x32xf32, #tpu.memory_space<vmem>>, vector<64x32xf32>,
    %61 = vector.extract_strided_slice %18 {offsets = [64, 0], sizes = [64, 32], strides = [1, 1]} : vector<128x32xbf16> to vector<64x32xbf16>
    %62 = vector.extract_strided_slice %19 {offsets = [64, 0], sizes = [64, 32], strides = [1, 1]} : vector<128x32xbf16> to vector<64x32xbf16>
    %63 = vector.extract_strided_slice %20 {offsets = [64, 0], sizes = [64, 32], strides = [1, 1]} : vector<128x32xbf16> to vector<64x32xbf16>
    %64 = vector.extract_strided_slice %6 {offsets = [64, 0], sizes = [64, 32], strides = [1, 1]} : vector<128x32xf32> to vector<64x32xf32>
    %cst_33 = arith.constant dense<0.000000e+00> : vector<32x32xf32>
    %65 = tpu.matmul %62, %63, %cst_33 {dimension_numbers = #tpu.dot_dimension_numbers<[0], [0], [1], [1], [0, 1, 1, 1], [], []>} : vector<64x32xbf16>, vector<64x32xbf16>, vector<32x32xf32> -> vector<32x32xf32>
    %66 = arith.mulf %65, %7 : vector<32x32xf32>
    %67 = arith.truncf %66 : vector<32x32xf32> to vector<32x32xbf16>
    %cst_34 = arith.constant 5.000000e-01 : f32
    %68 = vector.broadcast %cst_34 : f32 to vector<64x32xf32>
    %69 = arith.mulf %68, %64 : vector<64x32xf32>
    %cst_35 = arith.constant dense<0.000000e+00> : vector<64x32xf32>
    %70 = tpu.matmul %61, %67, %cst_35 {dimension_numbers = #tpu.dot_dimension_numbers<[1], [0], [0], [1], [0, 0, 1, 1], [], []>} : vector<64x32xbf16>, vector<32x32xbf16>, vector<64x32xf32> -> vector<64x32xf32>
    %cst_36 = arith.constant 0.318309873 : f32
    %71 = vector.broadcast %cst_36 : f32 to vector<64x32xf32>
    %72 = arith.mulf %71, %70 : vector<64x32xf32>
    %73 = arith.addf %69, %72 : vector<64x32xf32>
    %74 = arith.mulf %73, %73 : vector<64x32xf32>
    %cst_37 = arith.constant dense<0.000000e+00> : vector<64x32xf32>
    %75 = tpu.matmul %74, %7, %cst_37 {dimension_numbers = #tpu.dot_dimension_numbers<[1], [0], [0], [1], [0, 0, 1, 1], [], []>} : vector<64x32xf32>, vector<32x32xf32>, vector<64x32xf32> -> vector<64x32xf32>
    %76 = math.rsqrt %75 : vector<64x32xf32>
    %77 = arith.mulf %73, %76 : vector<64x32xf32>
    %cst_38 = arith.constant 0.000000e+00 : f32
    %78 = vector.broadcast %cst_38 : f32 to vector<64x32xf32>
    %79 = vector.extract_strided_slice %9 {offsets = [0, 0, 0], sizes = [1, 64, 64], strides = [1, 1, 1]} : vector<2x64x64xbf16> to vector<1x64x64xbf16>
    %80 = vector.shape_cast %79 : vector<1x64x64xbf16> to vector<64x64xbf16>
    %cst_39 = arith.constant dense<0.000000e+00> : vector<64x32xf32>
    %81 = tpu.matmul %80, %63, %cst_39 {dimension_numbers = #tpu.dot_dimension_numbers<[1], [0], [0], [1], [0, 0, 1, 1], [], []>} : vector<64x64xbf16>, vector<64x32xbf16>, vector<64x32xf32> -> vector<64x32xf32>
    %82 = vector.extract_strided_slice %8 {offsets = [0, 0], sizes = [1, 32], strides = [1, 1]} : vector<2x32xf32> to vector<1x32xf32>
    %83 = vector.broadcast %82 : vector<1x32xf32> to vector<64x32xf32>
    %84 = arith.mulf %81, %83 : vector<64x32xf32>
    %85 = arith.addf %78, %84 : vector<64x32xf32>
    %86 = vector.extract_strided_slice %9 {offsets = [1, 0, 0], sizes = [1, 64, 64], strides = [1, 1, 1]} : vector<2x64x64xbf16> to vector<1x64x64xbf16>
    %87 = vector.shape_cast %86 : vector<1x64x64xbf16> to vector<64x64xbf16>
    %cst_40 = arith.constant dense<0.000000e+00> : vector<64x32xf32>
    %88 = tpu.matmul %87, %63, %cst_40 {dimension_numbers = #tpu.dot_dimension_numbers<[1], [0], [0], [1], [0, 0, 1, 1], [], []>} : vector<64x64xbf16>, vector<64x32xbf16>, vector<64x32xf32> -> vector<64x32xf32>
    %89 = vector.extract_strided_slice %8 {offsets = [1, 0], sizes = [1, 32], strides = [1, 1]} : vector<2x32xf32> to vector<1x32xf32>
    %90 = vector.broadcast %89 : vector<1x32xf32> to vector<64x32xf32>
    %91 = arith.mulf %88, %90 : vector<64x32xf32>
    %92 = arith.addf %85, %91 : vector<64x32xf32>
    %93 = arith.addf %77, %92 : vector<64x32xf32>
    %94 = arith.truncf %93 : vector<64x32xf32> to vector<64x32xbf16>
    %cst_41 = arith.constant dense<0.000000e+00> : vector<64x32xf32>
    %95 = tpu.matmul %94, %21, %cst_41 {dimension_numbers = #tpu.dot_dimension_numbers<[1], [0], [0], [1], [0, 0, 1, 1], [], []>} : vector<64x32xbf16>, vector<32x32xbf16>, vector<64x32xf32> -> vector<64x32xf32>
    %96 = vector.broadcast %22 : vector<1x32xf32> to vector<64x32xf32>
    %97 = arith.addf %95, %96 : vector<64x32xf32>
    %c64 = arith.constant 64 : index
    %c0_42 = arith.constant 0 : index
    %98 = vector.load %arg10[%c64, %c0_42] : memref<128x32xf32, #tpu.memory_space<vmem>>, vector<64x32xf32>
    tpu.vector_store %arg10[%c64, %c0_42], %97 {strides = array<i32>} : memref<128x32xf32, #tpu.memory_space<vmem>>, vector<64x32xf32>,
    return
  }
  func.func @transform_0(%arg0: i32) -> (i32, i32) {
    %c0_i32 = arith.constant 0 : i32
    %c0_i32_0 = arith.constant 0 : i32
    %c0_i32_1 = arith.constant 0 : i32
    return %c0_i32, %c0_i32_0 : i32, i32
  }
  func.func @transform_1(%arg0: i32) -> (i32, i32) {
    %c0_i32 = arith.constant 0 : i32
    %c0_i32_0 = arith.constant 0 : i32
    %c0_i32_1 = arith.constant 0 : i32
    return %c0_i32, %c0_i32_0 : i32, i32
  }
  func.func @transform_2(%arg0: i32) -> (i32, i32) {
    %c0_i32 = arith.constant 0 : i32
    %c0_i32_0 = arith.constant 0 : i32
    %c0_i32_1 = arith.constant 0 : i32
    return %c0_i32, %c0_i32_0 : i32, i32
  }
  func.func @transform_3(%arg0: i32) -> (i32, i32) {
    %c0_i32 = arith.constant 0 : i32
    %c0_i32_0 = arith.constant 0 : i32
    %c0_i32_1 = arith.constant 0 : i32
    return %c0_i32, %c0_i32_0 : i32, i32
  }
  func.func @transform_4(%arg0: i32) -> (i32, i32) {
    %c0_i32 = arith.constant 0 : i32
    %c0_i32_0 = arith.constant 0 : i32
    %c0_i32_1 = arith.constant 0 : i32
    return %c0_i32, %c0_i32_0 : i32, i32
  }
  func.func @transform_5(%arg0: i32) -> (i32, i32) {
    %c0_i32 = arith.constant 0 : i32
    %c0_i32_0 = arith.constant 0 : i32
    %c0_i32_1 = arith.constant 0 : i32
    return %c0_i32, %c0_i32_0 : i32, i32
  }
  func.func @transform_6(%arg0: i32) -> (i32, i32) {
    %c0_i32 = arith.constant 0 : i32
    %c0_i32_0 = arith.constant 0 : i32
    %c0_i32_1 = arith.constant 0 : i32
    return %c0_i32, %c0_i32_0 : i32, i32
  }
  func.func @transform_7(%arg0: i32) -> (i32, i32) {
    %c0_i32 = arith.constant 0 : i32
    %c0_i32_0 = arith.constant 0 : i32
    %c0_i32_1 = arith.constant 0 : i32
    return %c0_i32, %c0_i32_0 : i32, i32
  }
  func.func @transform_8(%arg0: i32) -> (i32, i32, i32) {
    %c0_i32 = arith.constant 0 : i32
    %c0_i32_0 = arith.constant 0 : i32
    %c0_i32_1 = arith.constant 0 : i32
    %c0_i32_2 = arith.constant 0 : i32
    return %c0_i32, %c0_i32_0, %c0_i32_1 : i32, i32, i32
  }
  func.func @transform_9(%arg0: i32) -> (i32, i32) {
    %c0_i32 = arith.constant 0 : i32
    %c0_i32_0 = arith.constant 0 : i32
    %c0_i32_1 = arith.constant 0 : i32
    return %c0_i32, %c0_i32_0 : i32, i32
  }
}

</mosaic_0001>

<llo_original>
// kernel: tpu_custom_call.1
$region0: #{tpu_custom_call.1}
  #allocation0 [shape = 'u32[]', space=smem, size = 0x4, offset = 0x4, fixed_abs, tag = 'smem constant byte address 0x4 - core index']
  #allocation1 [shape = 'u32[144,128]{1,0:T(1,128)}', space=vmem, size = 0x12000, scoped, tag = 'internal scratch']
  %s0 = inlined_call_operand.vmem [shape: bf16[128,32], index: 0, kind: input, shape index: {}]
  %s1 = inlined_call_operand.vmem [shape: bf16[32,32], index: 1, kind: input, shape index: {}]
  %s2 = inlined_call_operand.hbm [shape: bf16[32,32], index: 2, kind: input, shape index: {}]
  %s3 = inlined_call_operand.hbm [shape: bf16[32,32], index: 3, kind: input, shape index: {}]
  %s4 = inlined_call_operand.hbm [shape: bf16[32,32], index: 4, kind: input, shape index: {}]
  %s5 = inlined_call_operand.vmem [shape: f32[1,32], index: 5, kind: input, shape index: {}]
  %s6 = inlined_call_operand.hbm [shape: f32[32,32], index: 6, kind: input, shape index: {}]
  %s7 = inlined_call_operand.vmem [shape: f32[2,32], index: 7, kind: input, shape index: {}]
  %s8 = inlined_call_operand.vmem [shape: bf16[2,64,64], index: 8, kind: input, shape index: {}]
  %s9 = inlined_call_operand.vmem [shape: f32[128,32], index: 9, kind: output, shape index: {}]
  %s10 = sld [smem:[#allocation0]]
  $region62: #{tpu_custom_call.1} parent=0
    _
  %s12 = ssub.s32 1, %s10
  %s13 = scalar_select 0, %s12, %s10
  $region1: #{tpu_custom_call.1} parent=0
    #allocation2 [shape = 'u8[8192]{0}', space=vmem, size = 0x2000, scoped, tag = 'input window, operand 2, single buffered']
    #allocation3 [shape = 's32[1]{0}', space=sflag, size = 0x4, scoped, tag = 'scoped memory for tpu_custom_call.1']
    #allocation4 [shape = 'u8[8192]{0}', space=vmem, size = 0x2000, scoped, tag = 'input window, operand 3, single buffered']
    #allocation5 [shape = 's32[1]{0}', space=sflag, size = 0x4, scoped, tag = 'scoped memory for tpu_custom_call.1']
    #allocation6 [shape = 'u8[8192]{0}', space=vmem, size = 0x2000, scoped, tag = 'input window, operand 4, single buffered']
    #allocation7 [shape = 'u8[16384]{0}', space=vmem, size = 0x4000, scoped, tag = 'input window, operand 6, single buffered']
    #allocation8 [shape = 's32[1]{0}', space=sflag, size = 0x4, scoped, tag = 'scoped memory for tpu_custom_call.1']
    %14 = vsyncpa [#allocation3], 0
    %15 = vsyncpa [#allocation5], 0
    %16 = vsyncpa [#allocation8], 0
    // Predicated region
    $region2: #{tpu_custom_call.1} parent=1 // pred_check
      _
    $region3: #{tpu_custom_call.1} parent=1 // pred_check_branch
      %18 = sbr.rel (0) target = $region5
    $region4: #{tpu_custom_call.1} parent=1 // pred_region
      _
    $region5: #{tpu_custom_call.1} parent=1 // pred_fallthru
      _
    // Predicated region
    $region6: #{tpu_custom_call.1} parent=1 // pred_check
      _
    $region7: #{tpu_custom_call.1} parent=1 // pred_check_branch
      %20 = sbr.rel (0) target = $region9
    $region8: #{tpu_custom_call.1} parent=1 // pred_region
      _
    $region9: #{tpu_custom_call.1} parent=1 // pred_fallthru
      _
    // Predicated region
    $region10: #{tpu_custom_call.1} parent=1 // pred_check
      _
    $region11: #{tpu_custom_call.1} parent=1 // pred_check_branch
      %22 = sbr.rel (0) target = $region13
    $region12: #{tpu_custom_call.1} parent=1 // pred_region
      %s24 = ssub.s32 256, 256
      %25 = vsyncadd [#allocation3], %s24
      %s26 = sshll.u32 [#allocation2], 4
      %s27 = int_to_ptr.vmem [resolvable:$true] %s26
      %32 = dma.hbm_to_vmem [thread:$0]  %s2, 256, %s27, [#allocation3], 64, 64, 4
    $region13: #{tpu_custom_call.1} parent=1 // pred_fallthru
      _
    // Predicated region
    $region14: #{tpu_custom_call.1} parent=1 // pred_check
      _
    $region15: #{tpu_custom_call.1} parent=1 // pred_check_branch
      %34 = sbr.rel (0) target = $region17
    $region16: #{tpu_custom_call.1} parent=1 // pred_region
      %s36 = ssub.s32 256, 256
      %37 = vsyncadd [#allocation5], %s36
      %s38 = sshll.u32 [#allocation4], 4
      %s39 = int_to_ptr.vmem [resolvable:$true] %s38
      %44 = dma.hbm_to_vmem [thread:$0]  %s3, 256, %s39, [#allocation5], 64, 64, 4
    $region17: #{tpu_custom_call.1} parent=1 // pred_fallthru
      _
    // Predicated region
    $region18: #{tpu_custom_call.1} parent=1 // pred_check
      _
    $region19: #{tpu_custom_call.1} parent=1 // pred_check_branch
      %46 = sbr.rel (0) target = $region21
    $region20: #{tpu_custom_call.1} parent=1 // pred_region
      %s48 = ssub.s32 256, 256
      %49 = vsyncadd [#allocation5], %s48
      %s50 = sshll.u32 [#allocation6], 4
      %s51 = int_to_ptr.vmem [resolvable:$true] %s50
      %56 = dma.hbm_to_vmem [thread:$0]  %s4, 256, %s51, [#allocation5], 64, 64, 4
    $region21: #{tpu_custom_call.1} parent=1 // pred_fallthru
      _
    // Predicated region
    $region22: #{tpu_custom_call.1} parent=1 // pred_check
      _
    $region23: #{tpu_custom_call.1} parent=1 // pred_check_branch
      %58 = sbr.rel (0) target = $region25
    $region24: #{tpu_custom_call.1} parent=1 // pred_region
      _
    $region25: #{tpu_custom_call.1} parent=1 // pred_fallthru
      _
    // Predicated region
    $region26: #{tpu_custom_call.1} parent=1 // pred_check
      _
    $region27: #{tpu_custom_call.1} parent=1 // pred_check_branch
      %60 = sbr.rel (0) target = $region29
    $region28: #{tpu_custom_call.1} parent=1 // pred_region
      %s62 = ssub.s32 512, 512
      %63 = vsyncadd [#allocation8], %s62
      %s64 = sshll.u32 [#allocation7], 4
      %s65 = int_to_ptr.vmem [resolvable:$true] %s64
      %70 = dma.hbm_to_vmem [thread:$0]  %s6, 512, %s65, [#allocation8], 128, 128, 8
    $region29: #{tpu_custom_call.1} parent=1 // pred_fallthru
      _
    // Predicated region
    $region30: #{tpu_custom_call.1} parent=1 // pred_check
      _
    $region31: #{tpu_custom_call.1} parent=1 // pred_check_branch
      %72 = sbr.rel (0) target = $region33
    $region32: #{tpu_custom_call.1} parent=1 // pred_region
      _
    $region33: #{tpu_custom_call.1} parent=1 // pred_fallthru
      _
    // Predicated region
    $region34: #{tpu_custom_call.1} parent=1 // pred_check
      _
    $region35: #{tpu_custom_call.1} parent=1 // pred_check_branch
      %74 = sbr.rel (0) target = $region37
    $region36: #{tpu_custom_call.1} parent=1 // pred_region
      _
    $region37: #{tpu_custom_call.1} parent=1 // pred_fallthru
      _
    // Predicated region
    $region38: #{tpu_custom_call.1} parent=1 // pred_check
      _
    $region39: #{tpu_custom_call.1} parent=1 // pred_check_branch
      %76 = sbr.rel (0) target = $region41
    $region40: #{tpu_custom_call.1} parent=1 // pred_region
      %77 = dma.done [#allocation3], 256
    $region41: #{tpu_custom_call.1} parent=1 // pred_fallthru
      _
    // Predicated region
    $region42: #{tpu_custom_call.1} parent=1 // pred_check
      _
    $region43: #{tpu_custom_call.1} parent=1 // pred_check_branch
      %79 = sbr.rel (0) target = $region45
    $region44: #{tpu_custom_call.1} parent=1 // pred_region
      %80 = dma.done [#allocation5], 256
    $region45: #{tpu_custom_call.1} parent=1 // pred_fallthru
      _
    // Predicated region
    $region46: #{tpu_custom_call.1} parent=1 // pred_check
      _
    $region47: #{tpu_custom_call.1} parent=1 // pred_check_branch
      %82 = sbr.rel (0) target = $region49
    $region48: #{tpu_custom_call.1} parent=1 // pred_region
      %83 = dma.done [#allocation5], 256
    $region49: #{tpu_custom_call.1} parent=1 // pred_fallthru
      _
    // Predicated region
    $region50: #{tpu_custom_call.1} parent=1 // pred_check
      _
    $region51: #{tpu_custom_call.1} parent=1 // pred_check_branch
      %85 = sbr.rel (0) target = $region53
    $region52: #{tpu_custom_call.1} parent=1 // pred_region
      %86 = dma.done [#allocation8], 512
    $region53: #{tpu_custom_call.1} parent=1 // pred_fallthru
      _
    %v88 = vld [vmem:[%s0] sm:$0xf]
    %v89 = vld [vmem:[%s0 + $0x4] sm:$0xf]
    %v90 = vld [vmem:[%s0 + $0x8] sm:$0xf]
    %v91 = vld [vmem:[%s0 + $0xc] sm:$0xf]
    %v92 = vld [vmem:[%s0 + $0x10] sm:$0xf]
    %v93 = vld [vmem:[%s0 + $0x14] sm:$0xf]
    %v94 = vld [vmem:[%s0 + $0x18] sm:$0xf]
    %v95 = vld [vmem:[%s0 + $0x1c] sm:$0xf]
    %v96 = vld [vmem:[%s0 + $0x20] sm:$0xf]
    %v97 = vld [vmem:[%s0 + $0x24] sm:$0xf]
    %v98 = vld [vmem:[%s0 + $0x28] sm:$0xf]
    %v99 = vld [vmem:[%s0 + $0x2c] sm:$0xf]
    %v100 = vld [vmem:[%s0 + $0x30] sm:$0xf]
    %v101 = vld [vmem:[%s0 + $0x34] sm:$0xf]
    %v102 = vld [vmem:[%s0 + $0x38] sm:$0xf]
    %v103 = vld [vmem:[%s0 + $0x3c] sm:$0xf]
    %v104 = vld [vmem:[%s1] sm:$0xf]
    %v105 = vld [vmem:[%s1 + $0x4] sm:$0xf]
    %v106 = vld [vmem:[%s1 + $0x8] sm:$0xf]
    %v107 = vld [vmem:[%s1 + $0xc] sm:$0xf]
    %v124 = vunpack.c.l.b16 %v88
    %v125 = vunpack.c.l.b16 %v89
    %v126 = vunpack.c.l.b16 %v90
    %v127 = vunpack.c.l.b16 %v91
    %v128 = vunpack.c.l.b16 %v92
    %v129 = vunpack.c.l.b16 %v93
    %v130 = vunpack.c.l.b16 %v94
    %v131 = vunpack.c.l.b16 %v95
    %v132 = vunpack.c.l.b16 %v96
    %v133 = vunpack.c.l.b16 %v97
    %v134 = vunpack.c.l.b16 %v98
    %v135 = vunpack.c.l.b16 %v99
    %v136 = vunpack.c.l.b16 %v100
    %v137 = vunpack.c.l.b16 %v101
    %v138 = vunpack.c.l.b16 %v102
    %v139 = vunpack.c.l.b16 %v103
    %v140 = vpack.c.b16 %v125, %v124
    %v141 = vpack.c.b16 %v127, %v126
    %v142 = vpack.c.b16 %v129, %v128
    %v143 = vpack.c.b16 %v131, %v130
    %v144 = vpack.c.b16 %v133, %v132
    %v145 = vpack.c.b16 %v135, %v134
    %v146 = vpack.c.b16 %v137, %v136
    %v147 = vpack.c.b16 %v139, %v138
    %v152 = vunpack.c.l.b16 %v104
    %v153 = vunpack.c.l.b16 %v105
    %v154 = vunpack.c.l.b16 %v106
    %v155 = vunpack.c.l.b16 %v107
    %v156 = vpack.c.b16 %v153, %v152
    %v157 = vpack.c.b16 %v155, %v154
    %vm160 = vcmask 261120
    %v162 = vsel %vm160, %v140, 0
    %v165 = vsel %vm160, %v141, 0
    %v168 = vsel %vm160, %v142, 0
    %v171 = vsel %vm160, %v143, 0
    %v174 = vsel %vm160, %v144, 0
    %v177 = vsel %vm160, %v145, 0
    %v180 = vsel %vm160, %v146, 0
    %v183 = vsel %vm160, %v147, 0
    %185 = vmatprep.subr.bf16.mxu0 0
    %186 = vmatpush1.bf16.msra.mxu0 0
    %187 = vmatprep.subr.bf16.mxu0 0
    %188 = vmatpush1.bf16.msra.mxu0 0
    %189 = vmatprep.subr.bf16.mxu0 0
    %190 = vmatpush1.bf16.msra.mxu0 0
    %191 = vmatprep.subr.bf16.mxu0 0
    %192 = vmatpush1.bf16.msra.mxu0 0
    %193 = vmatprep.subr.bf16.mxu0 0
    %194 = vmatpush1.bf16.msra.mxu0 0
    %195 = vmatprep.subr.bf16.mxu0 0
    %196 = vmatpush1.bf16.msra.mxu0 0
    %197 = vmatprep.subr.bf16.mxu0 0
    %198 = vmatpush1.bf16.msra.mxu0 %v157
    %199 = vmatprep.subr.bf16.mxu0 0
    %200 = vmatpush1.bf16.msra.mxu0 %v156
    %201 = vmatprep.subr.bf16.mxu0 0
    %202 = vmatpush2.bf16.msra.mxu0 0
    %203 = vmatprep.subr.bf16.mxu0 0
    %204 = vmatpush2.bf16.msra.mxu0 0
    %205 = vmatprep.subr.bf16.mxu0 0
    %206 = vmatpush2.bf16.msra.mxu0 0
    %207 = vmatprep.subr.bf16.mxu0 0
    %208 = vmatpush2.bf16.msra.mxu0 0
    %209 = vmatprep.subr.bf16.mxu0 0
    %210 = vmatpush2.bf16.msra.mxu0 0
    %211 = vmatprep.subr.bf16.mxu0 0
    %212 = vmatpush2.bf16.msra.mxu0 0
    %213 = vmatprep.subr.bf16.mxu0 0
    %214 = vmatpush2.bf16.msra.mxu0 0
    %215 = vmatprep.subr.bf16.mxu0 0
    %216 = vmatpush2.bf16.msra.mxu0 0
    %217 = vmatprep.mubr.bf16.mxu0 0
    %218 = vmatmul.mubr.bf16.gmra.mxu0 %v162
    %v219 = vpop.f32.mrf.mxu0
    %v220 = vadd.f32 0.0, %v219
    %v221 = vpop.f32.mrf.mxu0
    %v222 = vpop.f32.mrf.mxu0
    %v223 = vadd.f32 0.0, %v222
    %v224 = vpop.f32.mrf.mxu0
    %225 = vmatprep.mubr.bf16.mxu0 0
    %226 = vmatmul.mubr.bf16.gmra.mxu0 %v165
    %v227 = vpop.f32.mrf.mxu0
    %v228 = vadd.f32 0.0, %v227
    %v229 = vpop.f32.mrf.mxu0
    %v230 = vpop.f32.mrf.mxu0
    %v231 = vadd.f32 0.0, %v230
    %v232 = vpop.f32.mrf.mxu0
    %233 = vmatprep.mubr.bf16.mxu0 0
    %234 = vmatmul.mubr.bf16.gmra.mxu0 %v168
    %v235 = vpop.f32.mrf.mxu0
    %v236 = vadd.f32 0.0, %v235
    %v237 = vpop.f32.mrf.mxu0
    %v238 = vpop.f32.mrf.mxu0
    %v239 = vadd.f32 0.0, %v238
    %v240 = vpop.f32.mrf.mxu0
    %241 = vmatprep.mubr.bf16.mxu0 0
    %242 = vmatmul.mubr.bf16.gmra.mxu0 %v171
    %v243 = vpop.f32.mrf.mxu0
    %v244 = vadd.f32 0.0, %v243
    %v245 = vpop.f32.mrf.mxu0
    %v246 = vpop.f32.mrf.mxu0
    %v247 = vadd.f32 0.0, %v246
    %v248 = vpop.f32.mrf.mxu0
    %249 = vmatprep.mubr.bf16.mxu0 0
    %250 = vmatmul.mubr.bf16.gmra.mxu0 %v174
    %v251 = vpop.f32.mrf.mxu0
    %v252 = vadd.f32 0.0, %v251
    %v253 = vpop.f32.mrf.mxu0
    %v254 = vpop.f32.mrf.mxu0
    %v255 = vadd.f32 0.0, %v254
    %v256 = vpop.f32.mrf.mxu0
    %257 = vmatprep.mubr.bf16.mxu0 0
    %258 = vmatmul.mubr.bf16.gmra.mxu0 %v177
    %v259 = vpop.f32.mrf.mxu0
    %v260 = vadd.f32 0.0, %v259
    %v261 = vpop.f32.mrf.mxu0
    %v262 = vpop.f32.mrf.mxu0
    %v263 = vadd.f32 0.0, %v262
    %v264 = vpop.f32.mrf.mxu0
    %265 = vmatprep.mubr.bf16.mxu0 0
    %266 = vmatmul.mubr.bf16.gmra.mxu0 %v180
    %v267 = vpop.f32.mrf.mxu0
    %v268 = vadd.f32 0.0, %v267
    %v269 = vpop.f32.mrf.mxu0
    %v270 = vpop.f32.mrf.mxu0
    %v271 = vadd.f32 0.0, %v270
    %v272 = vpop.f32.mrf.mxu0
    %273 = vmatprep.mubr.bf16.mxu0 0
    %274 = vmatmul.mubr.bf16.gmra.mxu0 %v183
    %v275 = vpop.f32.mrf.mxu0
    %v276 = vadd.f32 0.0, %v275
    %v277 = vpop.f32.mrf.mxu0
    %v278 = vpop.f32.mrf.mxu0
    %v279 = vadd.f32 0.0, %v278
    %v280 = vpop.f32.mrf.mxu0
    %281 = vdwg.mxu0
    %v282 = vld [vmem:[#allocation2] sm:$0xf]
    %v283 = vld [vmem:[#allocation2 + $0x4] sm:$0xf]
    %v284 = vld [vmem:[#allocation2 + $0x8] sm:$0xf]
    %v285 = vld [vmem:[#allocation2 + $0xc] sm:$0xf]
    %v290 = vunpack.c.l.b16 %v282
    %v291 = vunpack.c.l.b16 %v283
    %v292 = vunpack.c.l.b16 %v284
    %v293 = vunpack.c.l.b16 %v285
    %v294 = vpack.c.b16 %v291, %v290
    %v295 = vpack.c.b16 %v293, %v292
    %298 = vmatprep.subr.bf16.mxu0 0
    %299 = vmatpush1.bf16.msra.mxu0 0
    %300 = vmatprep.subr.bf16.mxu0 0
    %301 = vmatpush1.bf16.msra.mxu0 0
    %302 = vmatprep.subr.bf16.mxu0 0
    %303 = vmatpush1.bf16.msra.mxu0 0
    %304 = vmatprep.subr.bf16.mxu0 0
    %305 = vmatpush1.bf16.msra.mxu0 0
    %306 = vmatprep.subr.bf16.mxu0 0
    %307 = vmatpush1.bf16.msra.mxu0 0
    %308 = vmatprep.subr.bf16.mxu0 0
    %309 = vmatpush1.bf16.msra.mxu0 0
    %310 = vmatprep.subr.bf16.mxu0 0
    %311 = vmatpush1.bf16.msra.mxu0 %v295
    %312 = vmatprep.subr.bf16.mxu0 0
    %313 = vmatpush1.bf16.msra.mxu0 %v294
    %314 = vmatprep.subr.bf16.mxu0 0
    %315 = vmatpush2.bf16.msra.mxu0 0
    %316 = vmatprep.subr.bf16.mxu0 0
    %317 = vmatpush2.bf16.msra.mxu0 0
    %318 = vmatprep.subr.bf16.mxu0 0
    %319 = vmatpush2.bf16.msra.mxu0 0
    %320 = vmatprep.subr.bf16.mxu0 0
    %321 = vmatpush2.bf16.msra.mxu0 0
    %322 = vmatprep.subr.bf16.mxu0 0
    %323 = vmatpush2.bf16.msra.mxu0 0
    %324 = vmatprep.subr.bf16.mxu0 0
    %325 = vmatpush2.bf16.msra.mxu0 0
    %326 = vmatprep.subr.bf16.mxu0 0
    %327 = vmatpush2.bf16.msra.mxu0 0
    %328 = vmatprep.subr.bf16.mxu0 0
    %329 = vmatpush2.bf16.msra.mxu0 0
    %330 = vmatprep.mubr.bf16.mxu0 0
    %331 = vmatmul.mubr.bf16.gmra.mxu0 %v162
    %v332 = vpop.f32.mrf.mxu0
    %v333 = vadd.f32 0.0, %v332
    %v334 = vpop.f32.mrf.mxu0
    %v335 = vpop.f32.mrf.mxu0
    %v336 = vadd.f32 0.0, %v335
    %v337 = vpop.f32.mrf.mxu0
    %338 = vmatprep.mubr.bf16.mxu0 0
    %339 = vmatmul.mubr.bf16.gmra.mxu0 %v165
    %v340 = vpop.f32.mrf.mxu0
    %v341 = vadd.f32 0.0, %v340
    %v342 = vpop.f32.mrf.mxu0
    %v343 = vpop.f32.mrf.mxu0
    %v344 = vadd.f32 0.0, %v343
    %v345 = vpop.f32.mrf.mxu0
    %346 = vmatprep.mubr.bf16.mxu0 0
    %347 = vmatmul.mubr.bf16.gmra.mxu0 %v168
    %v348 = vpop.f32.mrf.mxu0
    %v349 = vadd.f32 0.0, %v348
    %v350 = vpop.f32.mrf.mxu0
    %v351 = vpop.f32.mrf.mxu0
    %v352 = vadd.f32 0.0, %v351
    %v353 = vpop.f32.mrf.mxu0
    %354 = vmatprep.mubr.bf16.mxu0 0
    %355 = vmatmul.mubr.bf16.gmra.mxu0 %v171
    %v356 = vpop.f32.mrf.mxu0
    %v357 = vadd.f32 0.0, %v356
    %v358 = vpop.f32.mrf.mxu0
    %v359 = vpop.f32.mrf.mxu0
    %v360 = vadd.f32 0.0, %v359
    %v361 = vpop.f32.mrf.mxu0
    %362 = vmatprep.mubr.bf16.mxu0 0
    %363 = vmatmul.mubr.bf16.gmra.mxu0 %v174
    %v364 = vpop.f32.mrf.mxu0
    %v365 = vadd.f32 0.0, %v364
    %v366 = vpop.f32.mrf.mxu0
    %v367 = vpop.f32.mrf.mxu0
    %v368 = vadd.f32 0.0, %v367
    %v369 = vpop.f32.mrf.mxu0
    %370 = vmatprep.mubr.bf16.mxu0 0
    %371 = vmatmul.mubr.bf16.gmra.mxu0 %v177
    %v372 = vpop.f32.mrf.mxu0
    %v373 = vadd.f32 0.0, %v372
    %v374 = vpop.f32.mrf.mxu0
    %v375 = vpop.f32.mrf.mxu0
    %v376 = vadd.f32 0.0, %v375
    %v377 = vpop.f32.mrf.mxu0
    %378 = vmatprep.mubr.bf16.mxu0 0
    %379 = vmatmul.mubr.bf16.gmra.mxu0 %v180
    %v380 = vpop.f32.mrf.mxu0
    %v381 = vadd.f32 0.0, %v380
    %v382 = vpop.f32.mrf.mxu0
    %v383 = vpop.f32.mrf.mxu0
    %v384 = vadd.f32 0.0, %v383
    %v385 = vpop.f32.mrf.mxu0
    %386 = vmatprep.mubr.bf16.mxu0 0
    %387 = vmatmul.mubr.bf16.gmra.mxu0 %v183
    %v388 = vpop.f32.mrf.mxu0
    %v389 = vadd.f32 0.0, %v388
    %v390 = vpop.f32.mrf.mxu0
    %v391 = vpop.f32.mrf.mxu0
    %v392 = vadd.f32 0.0, %v391
    %v393 = vpop.f32.mrf.mxu0
    %394 = vdwg.mxu0
    %v395 = vld [vmem:[#allocation4] sm:$0xf]
    %v396 = vld [vmem:[#allocation4 + $0x4] sm:$0xf]
    %v397 = vld [vmem:[#allocation4 + $0x8] sm:$0xf]
    %v398 = vld [vmem:[#allocation4 + $0xc] sm:$0xf]
    %v403 = vunpack.c.l.b16 %v395
    %v404 = vunpack.c.l.b16 %v396
    %v405 = vunpack.c.l.b16 %v397
    %v406 = vunpack.c.l.b16 %v398
    %v407 = vpack.c.b16 %v404, %v403
    %v408 = vpack.c.b16 %v406, %v405
    %411 = vmatprep.subr.bf16.mxu0 0
    %412 = vmatpush1.bf16.msra.mxu0 0
    %413 = vmatprep.subr.bf16.mxu0 0
    %414 = vmatpush1.bf16.msra.mxu0 0
    %415 = vmatprep.subr.bf16.mxu0 0
    %416 = vmatpush1.bf16.msra.mxu0 0
    %417 = vmatprep.subr.bf16.mxu0 0
    %418 = vmatpush1.bf16.msra.mxu0 0
    %419 = vmatprep.subr.bf16.mxu0 0
    %420 = vmatpush1.bf16.msra.mxu0 0
    %421 = vmatprep.subr.bf16.mxu0 0
    %422 = vmatpush1.bf16.msra.mxu0 0
    %423 = vmatprep.subr.bf16.mxu0 0
    %424 = vmatpush1.bf16.msra.mxu0 %v408
    %425 = vmatprep.subr.bf16.mxu0 0
    %426 = vmatpush1.bf16.msra.mxu0 %v407
    %427 = vmatprep.subr.bf16.mxu0 0
    %428 = vmatpush2.bf16.msra.mxu0 0
    %429 = vmatprep.subr.bf16.mxu0 0
    %430 = vmatpush2.bf16.msra.mxu0 0
    %431 = vmatprep.subr.bf16.mxu0 0
    %432 = vmatpush2.bf16.msra.mxu0 0
    %433 = vmatprep.subr.bf16.mxu0 0
    %434 = vmatpush2.bf16.msra.mxu0 0
    %435 = vmatprep.subr.bf16.mxu0 0
    %436 = vmatpush2.bf16.msra.mxu0 0
    %437 = vmatprep.subr.bf16.mxu0 0
    %438 = vmatpush2.bf16.msra.mxu0 0
    %439 = vmatprep.subr.bf16.mxu0 0
    %440 = vmatpush2.bf16.msra.mxu0 0
    %441 = vmatprep.subr.bf16.mxu0 0
    %442 = vmatpush2.bf16.msra.mxu0 0
    %443 = vmatprep.mubr.bf16.mxu0 0
    %444 = vmatmul.mubr.bf16.gmra.mxu0 %v162
    %v445 = vpop.f32.mrf.mxu0
    %v446 = vadd.f32 0.0, %v445
    %v447 = vpop.f32.mrf.mxu0
    %v448 = vpop.f32.mrf.mxu0
    %v449 = vadd.f32 0.0, %v448
    %v450 = vpop.f32.mrf.mxu0
    %451 = vmatprep.mubr.bf16.mxu0 0
    %452 = vmatmul.mubr.bf16.gmra.mxu0 %v165
    %v453 = vpop.f32.mrf.mxu0
    %v454 = vadd.f32 0.0, %v453
    %v455 = vpop.f32.mrf.mxu0
    %v456 = vpop.f32.mrf.mxu0
    %v457 = vadd.f32 0.0, %v456
    %v458 = vpop.f32.mrf.mxu0
    %459 = vmatprep.mubr.bf16.mxu0 0
    %460 = vmatmul.mubr.bf16.gmra.mxu0 %v168
    %v461 = vpop.f32.mrf.mxu0
    %v462 = vadd.f32 0.0, %v461
    %v463 = vpop.f32.mrf.mxu0
    %v464 = vpop.f32.mrf.mxu0
    %v465 = vadd.f32 0.0, %v464
    %v466 = vpop.f32.mrf.mxu0
    %467 = vmatprep.mubr.bf16.mxu0 0
    %468 = vmatmul.mubr.bf16.gmra.mxu0 %v171
    %v469 = vpop.f32.mrf.mxu0
    %v470 = vadd.f32 0.0, %v469
    %v471 = vpop.f32.mrf.mxu0
    %v472 = vpop.f32.mrf.mxu0
    %v473 = vadd.f32 0.0, %v472
    %v474 = vpop.f32.mrf.mxu0
    %475 = vmatprep.mubr.bf16.mxu0 0
    %476 = vmatmul.mubr.bf16.gmra.mxu0 %v174
    %v477 = vpop.f32.mrf.mxu0
    %v478 = vadd.f32 0.0, %v477
    %v479 = vpop.f32.mrf.mxu0
    %v480 = vpop.f32.mrf.mxu0
    %v481 = vadd.f32 0.0, %v480
    %v482 = vpop.f32.mrf.mxu0
    %483 = vmatprep.mubr.bf16.mxu0 0
    %484 = vmatmul.mubr.bf16.gmra.mxu0 %v177
    %v485 = vpop.f32.mrf.mxu0
    %v486 = vadd.f32 0.0, %v485
    %v487 = vpop.f32.mrf.mxu0
    %v488 = vpop.f32.mrf.mxu0
    %v489 = vadd.f32 0.0, %v488
    %v490 = vpop.f32.mrf.mxu0
    %491 = vmatprep.mubr.bf16.mxu0 0
    %492 = vmatmul.mubr.bf16.gmra.mxu0 %v180
    %v493 = vpop.f32.mrf.mxu0
    %v494 = vadd.f32 0.0, %v493
    %v495 = vpop.f32.mrf.mxu0
    %v496 = vpop.f32.mrf.mxu0
    %v497 = vadd.f32 0.0, %v496
    %v498 = vpop.f32.mrf.mxu0
    %499 = vmatprep.mubr.bf16.mxu0 0
    %500 = vmatmul.mubr.bf16.gmra.mxu0 %v183
    %v501 = vpop.f32.mrf.mxu0
    %v502 = vadd.f32 0.0, %v501
    %v503 = vpop.f32.mrf.mxu0
    %v504 = vpop.f32.mrf.mxu0
    %v505 = vadd.f32 0.0, %v504
    %v506 = vpop.f32.mrf.mxu0
    %507 = vdwg.mxu0
    %v508 = vld [vmem:[#allocation7] sm:$0xff]
    %v509 = vld [vmem:[#allocation7 + $0x8] sm:$0xff]
    %v510 = vld [vmem:[#allocation7 + $0x10] sm:$0xff]
    %v511 = vld [vmem:[#allocation7 + $0x18] sm:$0xff]
    %v512 = vld [vmem:[%s7] sm:$0x3]
    %v513 = vld [vmem:[%s8] sm:$0xf]
    %v514 = vld [vmem:[%s8 + $0x4] sm:$0xf]
    %v515 = vld [vmem:[%s8 + $0x8] sm:$0xf]
    %v516 = vld [vmem:[%s8 + $0xc] sm:$0xf]
    %v517 = vld [vmem:[%s8 + $0x10] sm:$0xf]
    %v518 = vld [vmem:[%s8 + $0x14] sm:$0xf]
    %v519 = vld [vmem:[%s8 + $0x18] sm:$0xf]
    %v520 = vld [vmem:[%s8 + $0x1c] sm:$0xf]
    %v521 = vld [vmem:[%s8 + $0x20] sm:$0xf]
    %v522 = vld [vmem:[%s8 + $0x24] sm:$0xf]
    %v523 = vld [vmem:[%s8 + $0x28] sm:$0xf]
    %v524 = vld [vmem:[%s8 + $0x2c] sm:$0xf]
    %v525 = vld [vmem:[%s8 + $0x30] sm:$0xf]
    %v526 = vld [vmem:[%s8 + $0x34] sm:$0xf]
    %v527 = vld [vmem:[%s8 + $0x38] sm:$0xf]
    %v528 = vld [vmem:[%s8 + $0x3c] sm:$0xf]
    %v529 = vmul.f32 %v220, %v220
    %v530 = vmul.f32 %v223, %v223
    %v531 = vmul.f32 %v228, %v228
    %v532 = vmul.f32 %v231, %v231
    %v533 = vmul.f32 %v236, %v236
    %v534 = vmul.f32 %v239, %v239
    %v535 = vmul.f32 %v244, %v244
    %v536 = vmul.f32 %v247, %v247
    %v537 = vmul.f32 %v252, %v252
    %v538 = vmul.f32 %v255, %v255
    %v539 = vmul.f32 %v260, %v260
    %v540 = vmul.f32 %v263, %v263
    %v541 = vmul.f32 %v268, %v268
    %v542 = vmul.f32 %v271, %v271
    %v543 = vmul.f32 %v276, %v276
    %v544 = vmul.f32 %v279, %v279
    %v546 = vsel %vm160, %v529, 0
    %v549 = vsel %vm160, %v530, 0
    %v552 = vsel %vm160, %v531, 0
    %v555 = vsel %vm160, %v532, 0
    %v558 = vsel %vm160, %v533, 0
    %v561 = vsel %vm160, %v534, 0
    %v564 = vsel %vm160, %v535, 0
    %v567 = vsel %vm160, %v536, 0
    %v570 = vsel %vm160, %v537, 0
    %v573 = vsel %vm160, %v538, 0
    %v576 = vsel %vm160, %v539, 0
    %v579 = vsel %vm160, %v540, 0
    %v582 = vsel %vm160, %v541, 0
    %v585 = vsel %vm160, %v542, 0
    %v588 = vsel %vm160, %v543, 0
    %v591 = vsel %vm160, %v544, 0
    %593 = vmatprep.subr.mxu0 0.0
    %594 = vmatpush1.msra.mxu0 0.0
    %595 = vmatprep.subr.mxu0 0.0
    %596 = vmatpush1.msra.mxu0 0.0
    %597 = vmatprep.subr.mxu0 0.0
    %598 = vmatpush1.msra.mxu0 0.0
    %599 = vmatprep.subr.mxu0 0.0
    %600 = vmatpush1.msra.mxu0 0.0
    %601 = vmatprep.subr.mxu0 0.0
    %602 = vmatpush1.msra.mxu0 0.0
    %603 = vmatprep.subr.mxu0 0.0
    %604 = vmatpush1.msra.mxu0 0.0
    %605 = vmatprep.subr.mxu0 0.0
    %606 = vmatpush1.msra.mxu0 0.0
    %607 = vmatprep.subr.mxu0 0.0
    %608 = vmatpush1.msra.mxu0 0.0
    %609 = vmatprep.subr.mxu0 0.0
    %610 = vmatpush1.msra.mxu0 0.0
    %611 = vmatprep.subr.mxu0 0.0
    %612 = vmatpush1.msra.mxu0 0.0
    %613 = vmatprep.subr.mxu0 0.0
    %614 = vmatpush1.msra.mxu0 0.0
    %615 = vmatprep.subr.mxu0 0.0
    %616 = vmatpush1.msra.mxu0 0.0
    %617 = vmatprep.subr.mxu0 0.0
    %618 = vmatpush1.msra.mxu0 %v511
    %619 = vmatprep.subr.mxu0 0.0
    %620 = vmatpush1.msra.mxu0 %v510
    %621 = vmatprep.subr.mxu0 0.0
    %622 = vmatpush1.msra.mxu0 %v509
    %623 = vmatprep.subr.mxu0 0.0
    %624 = vmatpush1.msra.mxu0 %v508
    %625 = vmatprep.subr.mxu0 0.0
    %626 = vmatpush2.msra.mxu0 0.0
    %627 = vmatprep.subr.mxu0 0.0
    %628 = vmatpush2.msra.mxu0 0.0
    %629 = vmatprep.subr.mxu0 0.0
    %630 = vmatpush2.msra.mxu0 0.0
    %631 = vmatprep.subr.mxu0 0.0
    %632 = vmatpush2.msra.mxu0 0.0
    %633 = vmatprep.subr.mxu0 0.0
    %634 = vmatpush2.msra.mxu0 0.0
    %635 = vmatprep.subr.mxu0 0.0
    %636 = vmatpush2.msra.mxu0 0.0
    %637 = vmatprep.subr.mxu0 0.0
    %638 = vmatpush2.msra.mxu0 0.0
    %639 = vmatprep.subr.mxu0 0.0
    %640 = vmatpush2.msra.mxu0 0.0
    %641 = vmatprep.subr.mxu0 0.0
    %642 = vmatpush2.msra.mxu0 0.0
    %643 = vmatprep.subr.mxu0 0.0
    %644 = vmatpush2.msra.mxu0 0.0
    %645 = vmatprep.subr.mxu0 0.0
    %646 = vmatpush2.msra.mxu0 0.0
    %647 = vmatprep.subr.mxu0 0.0
    %648 = vmatpush2.msra.mxu0 0.0
    %649 = vmatprep.subr.mxu0 0.0
    %650 = vmatpush2.msra.mxu0 0.0
    %651 = vmatprep.subr.mxu0 0.0
    %652 = vmatpush2.msra.mxu0 0.0
    %653 = vmatprep.subr.mxu0 0.0
    %654 = vmatpush2.msra.mxu0 0.0
    %655 = vmatprep.subr.mxu0 0.0
    %656 = vmatpush2.msra.mxu0 0.0
    %657 = vmatprep.mubr.f32.mxu0 0.0
    %658 = vmatmul.mubr.f32.gmra.mxu0 %v546
    %v659 = vpop.f32.mrf.mxu0
    %v660 = vadd.f32 0.0, %v659
    %v661 = vpop.f32.mrf.mxu0
    %662 = vmatprep.mubr.f32.mxu0 0.0
    %663 = vmatmul.mubr.f32.gmra.mxu0 %v549
    %v664 = vpop.f32.mrf.mxu0
    %v665 = vadd.f32 0.0, %v664
    %v666 = vpop.f32.mrf.mxu0
    %667 = vmatprep.mubr.f32.mxu0 0.0
    %668 = vmatmul.mubr.f32.gmra.mxu0 %v552
    %v669 = vpop.f32.mrf.mxu0
    %v670 = vadd.f32 0.0, %v669
    %v671 = vpop.f32.mrf.mxu0
    %672 = vmatprep.mubr.f32.mxu0 0.0
    %673 = vmatmul.mubr.f32.gmra.mxu0 %v555
    %v674 = vpop.f32.mrf.mxu0
    %v675 = vadd.f32 0.0, %v674
    %v676 = vpop.f32.mrf.mxu0
    %677 = vmatprep.mubr.f32.mxu0 0.0
    %678 = vmatmul.mubr.f32.gmra.mxu0 %v558
    %v679 = vpop.f32.mrf.mxu0
    %v680 = vadd.f32 0.0, %v679
    %v681 = vpop.f32.mrf.mxu0
    %682 = vmatprep.mubr.f32.mxu0 0.0
    %683 = vmatmul.mubr.f32.gmra.mxu0 %v561
    %v684 = vpop.f32.mrf.mxu0
    %v685 = vadd.f32 0.0, %v684
    %v686 = vpop.f32.mrf.mxu0
    %687 = vmatprep.mubr.f32.mxu0 0.0
    %688 = vmatmul.mubr.f32.gmra.mxu0 %v564
    %v689 = vpop.f32.mrf.mxu0
    %v690 = vadd.f32 0.0, %v689
    %v691 = vpop.f32.mrf.mxu0
    %692 = vmatprep.mubr.f32.mxu0 0.0
    %693 = vmatmul.mubr.f32.gmra.mxu0 %v567
    %v694 = vpop.f32.mrf.mxu0
    %v695 = vadd.f32 0.0, %v694
    %v696 = vpop.f32.mrf.mxu0
    %697 = vmatprep.mubr.f32.mxu0 0.0
    %698 = vmatmul.mubr.f32.gmra.mxu0 %v570
    %v699 = vpop.f32.mrf.mxu0
    %v700 = vadd.f32 0.0, %v699
    %v701 = vpop.f32.mrf.mxu0
    %702 = vmatprep.mubr.f32.mxu0 0.0
    %703 = vmatmul.mubr.f32.gmra.mxu0 %v573
    %v704 = vpop.f32.mrf.mxu0
    %v705 = vadd.f32 0.0, %v704
    %v706 = vpop.f32.mrf.mxu0
    %707 = vmatprep.mubr.f32.mxu0 0.0
    %708 = vmatmul.mubr.f32.gmra.mxu0 %v576
    %v709 = vpop.f32.mrf.mxu0
    %v710 = vadd.f32 0.0, %v709
    %v711 = vpop.f32.mrf.mxu0
    %712 = vmatprep.mubr.f32.mxu0 0.0
    %713 = vmatmul.mubr.f32.gmra.mxu0 %v579
    %v714 = vpop.f32.mrf.mxu0
    %v715 = vadd.f32 0.0, %v714
    %v716 = vpop.f32.mrf.mxu0
    %717 = vmatprep.mubr.f32.mxu0 0.0
    %718 = vmatmul.mubr.f32.gmra.mxu0 %v582
    %v719 = vpop.f32.mrf.mxu0
    %v720 = vadd.f32 0.0, %v719
    %v721 = vpop.f32.mrf.mxu0
    %722 = vmatprep.mubr.f32.mxu0 0.0
    %723 = vmatmul.mubr.f32.gmra.mxu0 %v585
    %v724 = vpop.f32.mrf.mxu0
    %v725 = vadd.f32 0.0, %v724
    %v726 = vpop.f32.mrf.mxu0
    %727 = vmatprep.mubr.f32.mxu0 0.0
    %728 = vmatmul.mubr.f32.gmra.mxu0 %v588
    %v729 = vpop.f32.mrf.mxu0
    %v730 = vadd.f32 0.0, %v729
    %v731 = vpop.f32.mrf.mxu0
    %732 = vmatprep.mubr.f32.mxu0 0.0
    %733 = vmatmul.mubr.f32.gmra.mxu0 %v591
    %v734 = vpop.f32.mrf.mxu0
    %v735 = vadd.f32 0.0, %v734
    %v736 = vpop.f32.mrf.mxu0
    %737 = vdwg.mxu0
    %v738 = vrsqrt.pop %v660
    %v739 = vrsqrt.pop %v665
    %v740 = vrsqrt.pop %v670
    %v741 = vrsqrt.pop %v675
    %v742 = vrsqrt.pop %v680
    %v743 = vrsqrt.pop %v685
    %v744 = vrsqrt.pop %v690
    %v745 = vrsqrt.pop %v695
    %v746 = vrsqrt.pop %v700
    %v747 = vrsqrt.pop %v705
    %v748 = vrsqrt.pop %v710
    %v749 = vrsqrt.pop %v715
    %v750 = vrsqrt.pop %v720
    %v751 = vrsqrt.pop %v725
    %v752 = vrsqrt.pop %v730
    %v753 = vrsqrt.pop %v735
    %v754 = vmul.f32 %v220, %v738
    %v755 = vmul.f32 %v223, %v739
    %v756 = vmul.f32 %v228, %v740
    %v757 = vmul.f32 %v231, %v741
    %v758 = vmul.f32 %v236, %v742
    %v759 = vmul.f32 %v239, %v743
    %v760 = vmul.f32 %v244, %v744
    %v761 = vmul.f32 %v247, %v745
    %v762 = vmul.f32 %v252, %v746
    %v763 = vmul.f32 %v255, %v747
    %v764 = vmul.f32 %v260, %v748
    %v765 = vmul.f32 %v263, %v749
    %v766 = vmul.f32 %v268, %v750
    %v767 = vmul.f32 %v271, %v751
    %v768 = vmul.f32 %v276, %v752
    %v769 = vmul.f32 %v279, %v753
    %v770 = vmul.f32 %v333, %v333
    %v771 = vmul.f32 %v336, %v336
    %v772 = vmul.f32 %v341, %v341
    %v773 = vmul.f32 %v344, %v344
    %v774 = vmul.f32 %v349, %v349
    %v775 = vmul.f32 %v352, %v352
    %v776 = vmul.f32 %v357, %v357
    %v777 = vmul.f32 %v360, %v360
    %v778 = vmul.f32 %v365, %v365
    %v779 = vmul.f32 %v368, %v368
    %v780 = vmul.f32 %v373, %v373
    %v781 = vmul.f32 %v376, %v376
    %v782 = vmul.f32 %v381, %v381
    %v783 = vmul.f32 %v384, %v384
    %v784 = vmul.f32 %v389, %v389
    %v785 = vmul.f32 %v392, %v392
    %v787 = vsel %vm160, %v770, 0
    %v790 = vsel %vm160, %v771, 0
    %v793 = vsel %vm160, %v772, 0
    %v796 = vsel %vm160, %v773, 0
    %v799 = vsel %vm160, %v774, 0
    %v802 = vsel %vm160, %v775, 0
    %v805 = vsel %vm160, %v776, 0
    %v808 = vsel %vm160, %v777, 0
    %v811 = vsel %vm160, %v778, 0
    %v814 = vsel %vm160, %v779, 0
    %v817 = vsel %vm160, %v780, 0
    %v820 = vsel %vm160, %v781, 0
    %v823 = vsel %vm160, %v782, 0
    %v826 = vsel %vm160, %v783, 0
    %v829 = vsel %vm160, %v784, 0
    %v832 = vsel %vm160, %v785, 0
    %834 = vmatprep.subr.mxu0 0.0
    %835 = vmatpush1.msra.mxu0 0.0
    %836 = vmatprep.subr.mxu0 0.0
    %837 = vmatpush1.msra.mxu0 0.0
    %838 = vmatprep.subr.mxu0 0.0
    %839 = vmatpush1.msra.mxu0 0.0
    %840 = vmatprep.subr.mxu0 0.0
    %841 = vmatpush1.msra.mxu0 0.0
    %842 = vmatprep.subr.mxu0 0.0
    %843 = vmatpush1.msra.mxu0 0.0
    %844 = vmatprep.subr.mxu0 0.0
    %845 = vmatpush1.msra.mxu0 0.0
    %846 = vmatprep.subr.mxu0 0.0
    %847 = vmatpush1.msra.mxu0 0.0
    %848 = vmatprep.subr.mxu0 0.0
    %849 = vmatpush1.msra.mxu0 0.0
    %850 = vmatprep.subr.mxu0 0.0
    %851 = vmatpush1.msra.mxu0 0.0
    %852 = vmatprep.subr.mxu0 0.0
    %853 = vmatpush1.msra.mxu0 0.0
    %854 = vmatprep.subr.mxu0 0.0
    %855 = vmatpush1.msra.mxu0 0.0
    %856 = vmatprep.subr.mxu0 0.0
    %857 = vmatpush1.msra.mxu0 0.0
    %858 = vmatprep.subr.mxu0 0.0
    %859 = vmatpush1.msra.mxu0 %v511
    %860 = vmatprep.subr.mxu0 0.0
    %861 = vmatpush1.msra.mxu0 %v510
    %862 = vmatprep.subr.mxu0 0.0
    %863 = vmatpush1.msra.mxu0 %v509
    %864 = vmatprep.subr.mxu0 0.0
    %865 = vmatpush1.msra.mxu0 %v508
    %866 = vmatprep.subr.mxu0 0.0
    %867 = vmatpush2.msra.mxu0 0.0
    %868 = vmatprep.subr.mxu0 0.0
    %869 = vmatpush2.msra.mxu0 0.0
    %870 = vmatprep.subr.mxu0 0.0
    %871 = vmatpush2.msra.mxu0 0.0
    %872 = vmatprep.subr.mxu0 0.0
    %873 = vmatpush2.msra.mxu0 0.0
    %874 = vmatprep.subr.mxu0 0.0
    %875 = vmatpush2.msra.mxu0 0.0
    %876 = vmatprep.subr.mxu0 0.0
    %877 = vmatpush2.msra.mxu0 0.0
    %878 = vmatprep.subr.mxu0 0.0
    %879 = vmatpush2.msra.mxu0 0.0
    %880 = vmatprep.subr.mxu0 0.0
    %881 = vmatpush2.msra.mxu0 0.0
    %882 = vmatprep.subr.mxu0 0.0
    %883 = vmatpush2.msra.mxu0 0.0
    %884 = vmatprep.subr.mxu0 0.0
    %885 = vmatpush2.msra.mxu0 0.0
    %886 = vmatprep.subr.mxu0 0.0
    %887 = vmatpush2.msra.mxu0 0.0
    %888 = vmatprep.subr.mxu0 0.0
    %889 = vmatpush2.msra.mxu0 0.0
    %890 = vmatprep.subr.mxu0 0.0
    %891 = vmatpush2.msra.mxu0 0.0
    %892 = vmatprep.subr.mxu0 0.0
    %893 = vmatpush2.msra.mxu0 0.0
    %894 = vmatprep.subr.mxu0 0.0
    %895 = vmatpush2.msra.mxu0 0.0
    %896 = vmatprep.subr.mxu0 0.0
    %897 = vmatpush2.msra.mxu0 0.0
    %898 = vmatprep.mubr.f32.mxu0 0.0
    %899 = vmatmul.mubr.f32.gmra.mxu0 %v787
    %v900 = vpop.f32.mrf.mxu0
    %v901 = vadd.f32 0.0, %v900
    %v902 = vpop.f32.mrf.mxu0
    %903 = vmatprep.mubr.f32.mxu0 0.0
    %904 = vmatmul.mubr.f32.gmra.mxu0 %v790
    %v905 = vpop.f32.mrf.mxu0
    %v906 = vadd.f32 0.0, %v905
    %v907 = vpop.f32.mrf.mxu0
    %908 = vmatprep.mubr.f32.mxu0 0.0
    %909 = vmatmul.mubr.f32.gmra.mxu0 %v793
    %v910 = vpop.f32.mrf.mxu0
    %v911 = vadd.f32 0.0, %v910
    %v912 = vpop.f32.mrf.mxu0
    %913 = vmatprep.mubr.f32.mxu0 0.0
    %914 = vmatmul.mubr.f32.gmra.mxu0 %v796
    %v915 = vpop.f32.mrf.mxu0
    %v916 = vadd.f32 0.0, %v915
    %v917 = vpop.f32.mrf.mxu0
    %918 = vmatprep.mubr.f32.mxu0 0.0
    %919 = vmatmul.mubr.f32.gmra.mxu0 %v799
    %v920 = vpop.f32.mrf.mxu0
    %v921 = vadd.f32 0.0, %v920
    %v922 = vpop.f32.mrf.mxu0
    %923 = vmatprep.mubr.f32.mxu0 0.0
    %924 = vmatmul.mubr.f32.gmra.mxu0 %v802
    %v925 = vpop.f32.mrf.mxu0
    %v926 = vadd.f32 0.0, %v925
    %v927 = vpop.f32.mrf.mxu0
    %928 = vmatprep.mubr.f32.mxu0 0.0
    %929 = vmatmul.mubr.f32.gmra.mxu0 %v805
    %v930 = vpop.f32.mrf.mxu0
    %v931 = vadd.f32 0.0, %v930
    %v932 = vpop.f32.mrf.mxu0
    %933 = vmatprep.mubr.f32.mxu0 0.0
    %934 = vmatmul.mubr.f32.gmra.mxu0 %v808
    %v935 = vpop.f32.mrf.mxu0
    %v936 = vadd.f32 0.0, %v935
    %v937 = vpop.f32.mrf.mxu0
    %938 = vmatprep.mubr.f32.mxu0 0.0
    %939 = vmatmul.mubr.f32.gmra.mxu0 %v811
    %v940 = vpop.f32.mrf.mxu0
    %v941 = vadd.f32 0.0, %v940
    %v942 = vpop.f32.mrf.mxu0
    %943 = vmatprep.mubr.f32.mxu0 0.0
    %944 = vmatmul.mubr.f32.gmra.mxu0 %v814
    %v945 = vpop.f32.mrf.mxu0
    %v946 = vadd.f32 0.0, %v945
    %v947 = vpop.f32.mrf.mxu0
    %948 = vmatprep.mubr.f32.mxu0 0.0
    %949 = vmatmul.mubr.f32.gmra.mxu0 %v817
    %v950 = vpop.f32.mrf.mxu0
    %v951 = vadd.f32 0.0, %v950
    %v952 = vpop.f32.mrf.mxu0
    %953 = vmatprep.mubr.f32.mxu0 0.0
    %954 = vmatmul.mubr.f32.gmra.mxu0 %v820
    %v955 = vpop.f32.mrf.mxu0
    %v956 = vadd.f32 0.0, %v955
    %v957 = vpop.f32.mrf.mxu0
    %958 = vmatprep.mubr.f32.mxu0 0.0
    %959 = vmatmul.mubr.f32.gmra.mxu0 %v823
    %v960 = vpop.f32.mrf.mxu0
    %v961 = vadd.f32 0.0, %v960
    %v962 = vpop.f32.mrf.mxu0
    %963 = vmatprep.mubr.f32.mxu0 0.0
    %964 = vmatmul.mubr.f32.gmra.mxu0 %v826
    %v965 = vpop.f32.mrf.mxu0
    %v966 = vadd.f32 0.0, %v965
    %v967 = vpop.f32.mrf.mxu0
    %968 = vmatprep.mubr.f32.mxu0 0.0
    %969 = vmatmul.mubr.f32.gmra.mxu0 %v829
    %v970 = vpop.f32.mrf.mxu0
    %v971 = vadd.f32 0.0, %v970
    %v972 = vpop.f32.mrf.mxu0
    %973 = vmatprep.mubr.f32.mxu0 0.0
    %974 = vmatmul.mubr.f32.gmra.mxu0 %v832
    %v975 = vpop.f32.mrf.mxu0
    %v976 = vadd.f32 0.0, %v975
    %v977 = vpop.f32.mrf.mxu0
    %978 = vdwg.mxu0
    %v979 = vrsqrt.pop %v901
    %v980 = vrsqrt.pop %v906
    %v981 = vrsqrt.pop %v911
    %v982 = vrsqrt.pop %v916
    %v983 = vrsqrt.pop %v921
    %v984 = vrsqrt.pop %v926
    %v985 = vrsqrt.pop %v931
    %v986 = vrsqrt.pop %v936
    %v987 = vrsqrt.pop %v941
    %v988 = vrsqrt.pop %v946
    %v989 = vrsqrt.pop %v951
    %v990 = vrsqrt.pop %v956
    %v991 = vrsqrt.pop %v961
    %v992 = vrsqrt.pop %v966
    %v993 = vrsqrt.pop %v971
    %v994 = vrsqrt.pop %v976
    %v995 = vmul.f32 %v333, %v979
    %v996 = vmul.f32 %v336, %v980
    %v997 = vmul.f32 %v341, %v981
    %v998 = vmul.f32 %v344, %v982
    %v999 = vmul.f32 %v349, %v983
    %v1000 = vmul.f32 %v352, %v984
    %v1001 = vmul.f32 %v357, %v985
    %v1002 = vmul.f32 %v360, %v986
    %v1003 = vmul.f32 %v365, %v987
    %v1004 = vmul.f32 %v368, %v988
    %v1005 = vmul.f32 %v373, %v989
    %v1006 = vmul.f32 %v376, %v990
    %v1007 = vmul.f32 %v381, %v991
    %v1008 = vmul.f32 %v384, %v992
    %v1009 = vmul.f32 %v389, %v993
    %v1010 = vmul.f32 %v392, %v994
    %v1011 = vpack.c.bf16 %v755, %v754
    %v1012 = vpack.c.bf16 %v757, %v756
    %v1013 = vpack.c.bf16 %v759, %v758
    %v1014 = vpack.c.bf16 %v761, %v760
    %v1015 = vpack.c.bf16 %v763, %v762
    %v1016 = vpack.c.bf16 %v765, %v764
    %v1017 = vpack.c.bf16 %v767, %v766
    %v1018 = vpack.c.bf16 %v769, %v768
    %v1019 = vpack.c.bf16 %v996, %v995
    %v1020 = vpack.c.bf16 %v998, %v997
    %v1021 = vpack.c.bf16 %v1000, %v999
    %v1022 = vpack.c.bf16 %v1002, %v1001
    %v1023 = vpack.c.bf16 %v1004, %v1003
    %v1024 = vpack.c.bf16 %v1006, %v1005
    %v1025 = vpack.c.bf16 %v1008, %v1007
    %v1026 = vpack.c.bf16 %v1010, %v1009
    %v1027 = vpack.c.bf16 %v449, %v446
    %v1028 = vpack.c.bf16 %v457, %v454
    %v1029 = vpack.c.bf16 %v465, %v462
    %v1030 = vpack.c.bf16 %v473, %v470
    %v1031 = vpack.c.bf16 %v481, %v478
    %v1032 = vpack.c.bf16 %v489, %v486
    %v1033 = vpack.c.bf16 %v497, %v494
    %v1034 = vpack.c.bf16 %v505, %v502
    %v1035 = vld [vmem:[#allocation6] sm:$0xf]
    %v1036 = vld [vmem:[#allocation6 + $0x4] sm:$0xf]
    %v1037 = vld [vmem:[#allocation6 + $0x8] sm:$0xf]
    %v1038 = vld [vmem:[#allocation6 + $0xc] sm:$0xf]
    %v1039 = vld [vmem:[%s5] sm:$0x1]
    %1040 = vxpose.xlu0.c.b16.start [1/8] %v1019, 128
    %1041 = vxpose.xlu0.c.b16.cont [2/8] %v1020, 128
    %1042 = vxpose.xlu0.c.b16.cont [3/8] %v1021, 128
    %1043 = vxpose.xlu0.c.b16.cont [4/8] %v1022, 128
    %1044 = vxpose.xlu0.c.b16.cont [5/8] 0, 128
    %1045 = vxpose.xlu0.c.b16.cont [6/8] 0, 128
    %1046 = vxpose.xlu0.c.b16.cont [7/8] 0, 128
    %1047 = vxpose.xlu0.c.b16.end [8/8] 0, 128
    %v1048 = vpop.trf.xlu0
    %v1049 = vpop.trf.xlu0
    %v1050 = vpop.trf.xlu0
    %v1051 = vpop.trf.xlu0
    %v1052 = vpop.trf.xlu0
    %v1053 = vpop.trf.xlu0
    %v1054 = vpop.trf.xlu0
    %v1055 = vpop.trf.xlu0
    %vm1056 = vcmask 523264
    %v1058 = vsel %vm1056, %v1048, 0
    %v1061 = vsel %vm1056, %v1049, 0
    %1063 = vmatprep.subr.bf16.mxu0 0
    %1064 = vmatpush1.bf16.msra.mxu0 0
    %1065 = vmatprep.subr.bf16.mxu0 0
    %1066 = vmatpush1.bf16.msra.mxu0 0
    %1067 = vmatprep.subr.bf16.mxu0 0
    %1068 = vmatpush1.bf16.msra.mxu0 0
    %1069 = vmatprep.subr.bf16.mxu0 0
    %1070 = vmatpush1.bf16.msra.mxu0 0
    %1071 = vmatprep.subr.bf16.mxu0 0
    %1072 = vmatpush1.bf16.msra.mxu0 %v1030
    %1073 = vmatprep.subr.bf16.mxu0 0
    %1074 = vmatpush1.bf16.msra.mxu0 %v1029
    %1075 = vmatprep.subr.bf16.mxu0 0
    %1076 = vmatpush1.bf16.msra.mxu0 %v1028
    %1077 = vmatprep.subr.bf16.mxu0 0
    %1078 = vmatpush1.bf16.msra.mxu0 %v1027
    %1079 = vmatprep.subr.bf16.mxu0 0
    %1080 = vmatpush2.bf16.msra.mxu0 0
    %1081 = vmatprep.subr.bf16.mxu0 0
    %1082 = vmatpush2.bf16.msra.mxu0 0
    %1083 = vmatprep.subr.bf16.mxu0 0
    %1084 = vmatpush2.bf16.msra.mxu0 0
    %1085 = vmatprep.subr.bf16.mxu0 0
    %1086 = vmatpush2.bf16.msra.mxu0 0
    %1087 = vmatprep.subr.bf16.mxu0 0
    %1088 = vmatpush2.bf16.msra.mxu0 0
    %1089 = vmatprep.subr.bf16.mxu0 0
    %1090 = vmatpush2.bf16.msra.mxu0 0
    %1091 = vmatprep.subr.bf16.mxu0 0
    %1092 = vmatpush2.bf16.msra.mxu0 0
    %1093 = vmatprep.subr.bf16.mxu0 0
    %1094 = vmatpush2.bf16.msra.mxu0 0
    %1095 = vmatprep.mubr.bf16.mxu0 0
    %1096 = vmatmul.mubr.bf16.gmra.mxu0 %v1058
    %v1097 = vpop.f32.mrf.mxu0
    %v1098 = vadd.f32 0.0, %v1097
    %v1099 = vpop.f32.mrf.mxu0
    %v1100 = vpop.f32.mrf.mxu0
    %v1101 = vadd.f32 0.0, %v1100
    %v1102 = vpop.f32.mrf.mxu0
    %1103 = vmatprep.mubr.bf16.mxu0 0
    %1104 = vmatmul.mubr.bf16.gmra.mxu0 %v1061
    %v1105 = vpop.f32.mrf.mxu0
    %v1106 = vadd.f32 0.0, %v1105
    %v1107 = vpop.f32.mrf.mxu0
    %v1108 = vpop.f32.mrf.mxu0
    %v1109 = vadd.f32 0.0, %v1108
    %v1110 = vpop.f32.mrf.mxu0
    %1111 = vdwg.mxu0
    %v1112 = vmul.f32 %v1098, %v508
    %v1113 = vmul.f32 %v1101, %v509
    %v1114 = vmul.f32 %v1106, %v510
    %v1115 = vmul.f32 %v1109, %v511
    %v1116 = vpack.c.bf16 %v1113, %v1112
    %v1117 = vpack.c.bf16 %v1115, %v1114
    %v1118 = vmul.f32 %v446, 0.5
    %v1119 = vmul.f32 %v449, 0.5
    %v1120 = vmul.f32 %v454, 0.5
    %v1121 = vmul.f32 %v457, 0.5
    %v1122 = vmul.f32 %v462, 0.5
    %v1123 = vmul.f32 %v465, 0.5
    %v1124 = vmul.f32 %v470, 0.5
    %v1125 = vmul.f32 %v473, 0.5
    %v1127 = vsel %vm160, %v1011, 0
    %v1130 = vsel %vm160, %v1012, 0
    %v1133 = vsel %vm160, %v1013, 0
    %v1136 = vsel %vm160, %v1014, 0
    %1138 = vmatprep.subr.bf16.mxu0 0
    %1139 = vmatpush1.bf16.msra.mxu0 0
    %1140 = vmatprep.subr.bf16.mxu0 0
    %1141 = vmatpush1.bf16.msra.mxu0 0
    %1142 = vmatprep.subr.bf16.mxu0 0
    %1143 = vmatpush1.bf16.msra.mxu0 0
    %1144 = vmatprep.subr.bf16.mxu0 0
    %1145 = vmatpush1.bf16.msra.mxu0 0
    %1146 = vmatprep.subr.bf16.mxu0 0
    %1147 = vmatpush1.bf16.msra.mxu0 0
    %1148 = vmatprep.subr.bf16.mxu0 0
    %1149 = vmatpush1.bf16.msra.mxu0 0
    %1150 = vmatprep.subr.bf16.mxu0 0
    %1151 = vmatpush1.bf16.msra.mxu0 %v1117
    %1152 = vmatprep.subr.bf16.mxu0 0
    %1153 = vmatpush1.bf16.msra.mxu0 %v1116
    %1154 = vmatprep.subr.bf16.mxu0 0
    %1155 = vmatpush2.bf16.msra.mxu0 0
    %1156 = vmatprep.subr.bf16.mxu0 0
    %1157 = vmatpush2.bf16.msra.mxu0 0
    %1158 = vmatprep.subr.bf16.mxu0 0
    %1159 = vmatpush2.bf16.msra.mxu0 0
    %1160 = vmatprep.subr.bf16.mxu0 0
    %1161 = vmatpush2.bf16.msra.mxu0 0
    %1162 = vmatprep.subr.bf16.mxu0 0
    %1163 = vmatpush2.bf16.msra.mxu0 0
    %1164 = vmatprep.subr.bf16.mxu0 0
    %1165 = vmatpush2.bf16.msra.mxu0 0
    %1166 = vmatprep.subr.bf16.mxu0 0
    %1167 = vmatpush2.bf16.msra.mxu0 0
    %1168 = vmatprep.subr.bf16.mxu0 0
    %1169 = vmatpush2.bf16.msra.mxu0 0
    %1170 = vmatprep.mubr.bf16.mxu0 0
    %1171 = vmatmul.mubr.bf16.gmra.mxu0 %v1127
    %v1172 = vpop.f32.mrf.mxu0
    %v1173 = vadd.f32 0.0, %v1172
    %v1174 = vpop.f32.mrf.mxu0
    %v1175 = vpop.f32.mrf.mxu0
    %v1176 = vadd.f32 0.0, %v1175
    %v1177 = vpop.f32.mrf.mxu0
    %1178 = vmatprep.mubr.bf16.mxu0 0
    %1179 = vmatmul.mubr.bf16.gmra.mxu0 %v1130
    %v1180 = vpop.f32.mrf.mxu0
    %v1181 = vadd.f32 0.0, %v1180
    %v1182 = vpop.f32.mrf.mxu0
    %v1183 = vpop.f32.mrf.mxu0
    %v1184 = vadd.f32 0.0, %v1183
    %v1185 = vpop.f32.mrf.mxu0
    %1186 = vmatprep.mubr.bf16.mxu0 0
    %1187 = vmatmul.mubr.bf16.gmra.mxu0 %v1133
    %v1188 = vpop.f32.mrf.mxu0
    %v1189 = vadd.f32 0.0, %v1188
    %v1190 = vpop.f32.mrf.mxu0
    %v1191 = vpop.f32.mrf.mxu0
    %v1192 = vadd.f32 0.0, %v1191
    %v1193 = vpop.f32.mrf.mxu0
    %1194 = vmatprep.mubr.bf16.mxu0 0
    %1195 = vmatmul.mubr.bf16.gmra.mxu0 %v1136
    %v1196 = vpop.f32.mrf.mxu0
    %v1197 = vadd.f32 0.0, %v1196
    %v1198 = vpop.f32.mrf.mxu0
    %v1199 = vpop.f32.mrf.mxu0
    %v1200 = vadd.f32 0.0, %v1199
    %v1201 = vpop.f32.mrf.mxu0
    %1202 = vdwg.mxu0
    %v1203 = vmul.f32 %v1173, 0.31830987
    %v1204 = vmul.f32 %v1176, 0.31830987
    %v1205 = vmul.f32 %v1181, 0.31830987
    %v1206 = vmul.f32 %v1184, 0.31830987
    %v1207 = vmul.f32 %v1189, 0.31830987
    %v1208 = vmul.f32 %v1192, 0.31830987
    %v1209 = vmul.f32 %v1197, 0.31830987
    %v1210 = vmul.f32 %v1200, 0.31830987
    %v1211 = vadd.f32 %v1118, %v1203
    %v1212 = vadd.f32 %v1119, %v1204
    %v1213 = vadd.f32 %v1120, %v1205
    %v1214 = vadd.f32 %v1121, %v1206
    %v1215 = vadd.f32 %v1122, %v1207
    %v1216 = vadd.f32 %v1123, %v1208
    %v1217 = vadd.f32 %v1124, %v1209
    %v1218 = vadd.f32 %v1125, %v1210
    %v1219 = vmul.f32 %v1211, %v1211
    %v1220 = vmul.f32 %v1212, %v1212
    %v1221 = vmul.f32 %v1213, %v1213
    %v1222 = vmul.f32 %v1214, %v1214
    %v1223 = vmul.f32 %v1215, %v1215
    %v1224 = vmul.f32 %v1216, %v1216
    %v1225 = vmul.f32 %v1217, %v1217
    %v1226 = vmul.f32 %v1218, %v1218
    %v1228 = vsel %vm160, %v1219, 0
    %v1231 = vsel %vm160, %v1220, 0
    %v1234 = vsel %vm160, %v1221, 0
    %v1237 = vsel %vm160, %v1222, 0
    %v1240 = vsel %vm160, %v1223, 0
    %v1243 = vsel %vm160, %v1224, 0
    %v1246 = vsel %vm160, %v1225, 0
    %v1249 = vsel %vm160, %v1226, 0
    %1251 = vmatprep.subr.mxu0 0.0
    %1252 = vmatpush1.msra.mxu0 0.0
    %1253 = vmatprep.subr.mxu0 0.0
    %1254 = vmatpush1.msra.mxu0 0.0
    %1255 = vmatprep.subr.mxu0 0.0
    %1256 = vmatpush1.msra.mxu0 0.0
    %1257 = vmatprep.subr.mxu0 0.0
    %1258 = vmatpush1.msra.mxu0 0.0
    %1259 = vmatprep.subr.mxu0 0.0
    %1260 = vmatpush1.msra.mxu0 0.0
    %1261 = vmatprep.subr.mxu0 0.0
    %1262 = vmatpush1.msra.mxu0 0.0
    %1263 = vmatprep.subr.mxu0 0.0
    %1264 = vmatpush1.msra.mxu0 0.0
    %1265 = vmatprep.subr.mxu0 0.0
    %1266 = vmatpush1.msra.mxu0 0.0
    %1267 = vmatprep.subr.mxu0 0.0
    %1268 = vmatpush1.msra.mxu0 0.0
    %1269 = vmatprep.subr.mxu0 0.0
    %1270 = vmatpush1.msra.mxu0 0.0
    %1271 = vmatprep.subr.mxu0 0.0
    %1272 = vmatpush1.msra.mxu0 0.0
    %1273 = vmatprep.subr.mxu0 0.0
    %1274 = vmatpush1.msra.mxu0 0.0
    %1275 = vmatprep.subr.mxu0 0.0
    %1276 = vmatpush1.msra.mxu0 %v511
    %1277 = vmatprep.subr.mxu0 0.0
    %1278 = vmatpush1.msra.mxu0 %v510
    %1279 = vmatprep.subr.mxu0 0.0
    %1280 = vmatpush1.msra.mxu0 %v509
    %1281 = vmatprep.subr.mxu0 0.0
    %1282 = vmatpush1.msra.mxu0 %v508
    %1283 = vmatprep.subr.mxu0 0.0
    %1284 = vmatpush2.msra.mxu0 0.0
    %1285 = vmatprep.subr.mxu0 0.0
    %1286 = vmatpush2.msra.mxu0 0.0
    %1287 = vmatprep.subr.mxu0 0.0
    %1288 = vmatpush2.msra.mxu0 0.0
    %1289 = vmatprep.subr.mxu0 0.0
    %1290 = vmatpush2.msra.mxu0 0.0
    %1291 = vmatprep.subr.mxu0 0.0
    %1292 = vmatpush2.msra.mxu0 0.0
    %1293 = vmatprep.subr.mxu0 0.0
    %1294 = vmatpush2.msra.mxu0 0.0
    %1295 = vmatprep.subr.mxu0 0.0
    %1296 = vmatpush2.msra.mxu0 0.0
    %1297 = vmatprep.subr.mxu0 0.0
    %1298 = vmatpush2.msra.mxu0 0.0
    %1299 = vmatprep.subr.mxu0 0.0
    %1300 = vmatpush2.msra.mxu0 0.0
    %1301 = vmatprep.subr.mxu0 0.0
    %1302 = vmatpush2.msra.mxu0 0.0
    %1303 = vmatprep.subr.mxu0 0.0
    %1304 = vmatpush2.msra.mxu0 0.0
    %1305 = vmatprep.subr.mxu0 0.0
    %1306 = vmatpush2.msra.mxu0 0.0
    %1307 = vmatprep.subr.mxu0 0.0
    %1308 = vmatpush2.msra.mxu0 0.0
    %1309 = vmatprep.subr.mxu0 0.0
    %1310 = vmatpush2.msra.mxu0 0.0
    %1311 = vmatprep.subr.mxu0 0.0
    %1312 = vmatpush2.msra.mxu0 0.0
    %1313 = vmatprep.subr.mxu0 0.0
    %1314 = vmatpush2.msra.mxu0 0.0
    %1315 = vmatprep.mubr.f32.mxu0 0.0
    %1316 = vmatmul.mubr.f32.gmra.mxu0 %v1228
    %v1317 = vpop.f32.mrf.mxu0
    %v1318 = vadd.f32 0.0, %v1317
    %v1319 = vpop.f32.mrf.mxu0
    %1320 = vmatprep.mubr.f32.mxu0 0.0
    %1321 = vmatmul.mubr.f32.gmra.mxu0 %v1231
    %v1322 = vpop.f32.mrf.mxu0
    %v1323 = vadd.f32 0.0, %v1322
    %v1324 = vpop.f32.mrf.mxu0
    %1325 = vmatprep.mubr.f32.mxu0 0.0
    %1326 = vmatmul.mubr.f32.gmra.mxu0 %v1234
    %v1327 = vpop.f32.mrf.mxu0
    %v1328 = vadd.f32 0.0, %v1327
    %v1329 = vpop.f32.mrf.mxu0
    %1330 = vmatprep.mubr.f32.mxu0 0.0
    %1331 = vmatmul.mubr.f32.gmra.mxu0 %v1237
    %v1332 = vpop.f32.mrf.mxu0
    %v1333 = vadd.f32 0.0, %v1332
    %v1334 = vpop.f32.mrf.mxu0
    %1335 = vmatprep.mubr.f32.mxu0 0.0
    %1336 = vmatmul.mubr.f32.gmra.mxu0 %v1240
    %v1337 = vpop.f32.mrf.mxu0
    %v1338 = vadd.f32 0.0, %v1337
    %v1339 = vpop.f32.mrf.mxu0
    %1340 = vmatprep.mubr.f32.mxu0 0.0
    %1341 = vmatmul.mubr.f32.gmra.mxu0 %v1243
    %v1342 = vpop.f32.mrf.mxu0
    %v1343 = vadd.f32 0.0, %v1342
    %v1344 = vpop.f32.mrf.mxu0
    %1345 = vmatprep.mubr.f32.mxu0 0.0
    %1346 = vmatmul.mubr.f32.gmra.mxu0 %v1246
    %v1347 = vpop.f32.mrf.mxu0
    %v1348 = vadd.f32 0.0, %v1347
    %v1349 = vpop.f32.mrf.mxu0
    %1350 = vmatprep.mubr.f32.mxu0 0.0
    %1351 = vmatmul.mubr.f32.gmra.mxu0 %v1249
    %v1352 = vpop.f32.mrf.mxu0
    %v1353 = vadd.f32 0.0, %v1352
    %v1354 = vpop.f32.mrf.mxu0
    %1355 = vdwg.mxu0
    %v1356 = vrsqrt.pop %v1318
    %v1357 = vrsqrt.pop %v1323
    %v1358 = vrsqrt.pop %v1328
    %v1359 = vrsqrt.pop %v1333
    %v1360 = vrsqrt.pop %v1338
    %v1361 = vrsqrt.pop %v1343
    %v1362 = vrsqrt.pop %v1348
    %v1363 = vrsqrt.pop %v1353
    %v1364 = vmul.f32 %v1211, %v1356
    %v1365 = vmul.f32 %v1212, %v1357
    %v1366 = vmul.f32 %v1213, %v1358
    %v1367 = vmul.f32 %v1214, %v1359
    %v1368 = vmul.f32 %v1215, %v1360
    %v1369 = vmul.f32 %v1216, %v1361
    %v1370 = vmul.f32 %v1217, %v1362
    %v1371 = vmul.f32 %v1218, %v1363
    %v1380 = vunpack.c.l.b16 %v513
    %v1381 = vunpack.c.l.b16 %v514
    %v1382 = vunpack.c.l.b16 %v515
    %v1383 = vunpack.c.l.b16 %v516
    %v1384 = vunpack.c.l.b16 %v517
    %v1385 = vunpack.c.l.b16 %v518
    %v1386 = vunpack.c.l.b16 %v519
    %v1387 = vunpack.c.l.b16 %v520
    %v1388 = vpack.c.b16 %v1381, %v1380
    %v1389 = vpack.c.b16 %v1383, %v1382
    %v1390 = vpack.c.b16 %v1385, %v1384
    %v1391 = vpack.c.b16 %v1387, %v1386
    %v1393 = vsel %vm1056, %v1388, 0
    %v1396 = vsel %vm1056, %v1389, 0
    %v1399 = vsel %vm1056, %v1390, 0
    %v1402 = vsel %vm1056, %v1391, 0
    %1404 = vmatprep.subr.bf16.mxu0 0
    %1405 = vmatpush1.bf16.msra.mxu0 0
    %1406 = vmatprep.subr.bf16.mxu0 0
    %1407 = vmatpush1.bf16.msra.mxu0 0
    %1408 = vmatprep.subr.bf16.mxu0 0
    %1409 = vmatpush1.bf16.msra.mxu0 0
    %1410 = vmatprep.subr.bf16.mxu0 0
    %1411 = vmatpush1.bf16.msra.mxu0 0
    %1412 = vmatprep.subr.bf16.mxu0 0
    %1413 = vmatpush1.bf16.msra.mxu0 %v1030
    %1414 = vmatprep.subr.bf16.mxu0 0
    %1415 = vmatpush1.bf16.msra.mxu0 %v1029
    %1416 = vmatprep.subr.bf16.mxu0 0
    %1417 = vmatpush1.bf16.msra.mxu0 %v1028
    %1418 = vmatprep.subr.bf16.mxu0 0
    %1419 = vmatpush1.bf16.msra.mxu0 %v1027
    %1420 = vmatprep.subr.bf16.mxu0 0
    %1421 = vmatpush2.bf16.msra.mxu0 0
    %1422 = vmatprep.subr.bf16.mxu0 0
    %1423 = vmatpush2.bf16.msra.mxu0 0
    %1424 = vmatprep.subr.bf16.mxu0 0
    %1425 = vmatpush2.bf16.msra.mxu0 0
    %1426 = vmatprep.subr.bf16.mxu0 0
    %1427 = vmatpush2.bf16.msra.mxu0 0
    %1428 = vmatprep.subr.bf16.mxu0 0
    %1429 = vmatpush2.bf16.msra.mxu0 0
    %1430 = vmatprep.subr.bf16.mxu0 0
    %1431 = vmatpush2.bf16.msra.mxu0 0
    %1432 = vmatprep.subr.bf16.mxu0 0
    %1433 = vmatpush2.bf16.msra.mxu0 0
    %1434 = vmatprep.subr.bf16.mxu0 0
    %1435 = vmatpush2.bf16.msra.mxu0 0
    %1436 = vmatprep.mubr.bf16.mxu0 0
    %1437 = vmatmul.mubr.bf16.gmra.mxu0 %v1393
    %v1438 = vpop.f32.mrf.mxu0
    %v1439 = vadd.f32 0.0, %v1438
    %v1440 = vpop.f32.mrf.mxu0
    %v1441 = vpop.f32.mrf.mxu0
    %v1442 = vadd.f32 0.0, %v1441
    %v1443 = vpop.f32.mrf.mxu0
    %1444 = vmatprep.mubr.bf16.mxu0 0
    %1445 = vmatmul.mubr.bf16.gmra.mxu0 %v1396
    %v1446 = vpop.f32.mrf.mxu0
    %v1447 = vadd.f32 0.0, %v1446
    %v1448 = vpop.f32.mrf.mxu0
    %v1449 = vpop.f32.mrf.mxu0
    %v1450 = vadd.f32 0.0, %v1449
    %v1451 = vpop.f32.mrf.mxu0
    %1452 = vmatprep.mubr.bf16.mxu0 0
    %1453 = vmatmul.mubr.bf16.gmra.mxu0 %v1399
    %v1454 = vpop.f32.mrf.mxu0
    %v1455 = vadd.f32 0.0, %v1454
    %v1456 = vpop.f32.mrf.mxu0
    %v1457 = vpop.f32.mrf.mxu0
    %v1458 = vadd.f32 0.0, %v1457
    %v1459 = vpop.f32.mrf.mxu0
    %1460 = vmatprep.mubr.bf16.mxu0 0
    %1461 = vmatmul.mubr.bf16.gmra.mxu0 %v1402
    %v1462 = vpop.f32.mrf.mxu0
    %v1463 = vadd.f32 0.0, %v1462
    %v1464 = vpop.f32.mrf.mxu0
    %v1465 = vpop.f32.mrf.mxu0
    %v1466 = vadd.f32 0.0, %v1465
    %v1467 = vpop.f32.mrf.mxu0
    %1468 = vdwg.mxu0
    %v1469 = vlaneseq
    %v1470 = vshrl.u32 %v1469, 7
    %v1471 = vsub.s32 0, %v1470
    %v1472 = vrot.slane %v512, %v1471
    %v1473 = vmul.f32 %v1439, %v1472
    %v1474 = vmul.f32 %v1442, %v1472
    %v1475 = vmul.f32 %v1447, %v1472
    %v1476 = vmul.f32 %v1450, %v1472
    %v1477 = vmul.f32 %v1455, %v1472
    %v1478 = vmul.f32 %v1458, %v1472
    %v1479 = vmul.f32 %v1463, %v1472
    %v1480 = vmul.f32 %v1466, %v1472
    %v1481 = vadd.f32 %v1473, 0.0
    %v1482 = vadd.f32 %v1474, 0.0
    %v1483 = vadd.f32 %v1475, 0.0
    %v1484 = vadd.f32 %v1476, 0.0
    %v1485 = vadd.f32 %v1477, 0.0
    %v1486 = vadd.f32 %v1478, 0.0
    %v1487 = vadd.f32 %v1479, 0.0
    %v1488 = vadd.f32 %v1480, 0.0
    %v1497 = vunpack.c.l.b16 %v521
    %v1498 = vunpack.c.l.b16 %v522
    %v1499 = vunpack.c.l.b16 %v523
    %v1500 = vunpack.c.l.b16 %v524
    %v1501 = vunpack.c.l.b16 %v525
    %v1502 = vunpack.c.l.b16 %v526
    %v1503 = vunpack.c.l.b16 %v527
    %v1504 = vunpack.c.l.b16 %v528
    %v1505 = vpack.c.b16 %v1498, %v1497
    %v1506 = vpack.c.b16 %v1500, %v1499
    %v1507 = vpack.c.b16 %v1502, %v1501
    %v1508 = vpack.c.b16 %v1504, %v1503
    %v1510 = vsel %vm1056, %v1505, 0
    %v1513 = vsel %vm1056, %v1506, 0
    %v1516 = vsel %vm1056, %v1507, 0
    %v1519 = vsel %vm1056, %v1508, 0
    %1521 = vmatprep.subr.bf16.mxu0 0
    %1522 = vmatpush1.bf16.msra.mxu0 0
    %1523 = vmatprep.subr.bf16.mxu0 0
    %1524 = vmatpush1.bf16.msra.mxu0 0
    %1525 = vmatprep.subr.bf16.mxu0 0
    %1526 = vmatpush1.bf16.msra.mxu0 0
    %1527 = vmatprep.subr.bf16.mxu0 0
    %1528 = vmatpush1.bf16.msra.mxu0 0
    %1529 = vmatprep.subr.bf16.mxu0 0
    %1530 = vmatpush1.bf16.msra.mxu0 %v1030
    %1531 = vmatprep.subr.bf16.mxu0 0
    %1532 = vmatpush1.bf16.msra.mxu0 %v1029
    %1533 = vmatprep.subr.bf16.mxu0 0
    %1534 = vmatpush1.bf16.msra.mxu0 %v1028
    %1535 = vmatprep.subr.bf16.mxu0 0
    %1536 = vmatpush1.bf16.msra.mxu0 %v1027
    %1537 = vmatprep.subr.bf16.mxu0 0
    %1538 = vmatpush2.bf16.msra.mxu0 0
    %1539 = vmatprep.subr.bf16.mxu0 0
    %1540 = vmatpush2.bf16.msra.mxu0 0
    %1541 = vmatprep.subr.bf16.mxu0 0
    %1542 = vmatpush2.bf16.msra.mxu0 0
    %1543 = vmatprep.subr.bf16.mxu0 0
    %1544 = vmatpush2.bf16.msra.mxu0 0
    %1545 = vmatprep.subr.bf16.mxu0 0
    %1546 = vmatpush2.bf16.msra.mxu0 0
    %1547 = vmatprep.subr.bf16.mxu0 0
    %1548 = vmatpush2.bf16.msra.mxu0 0
    %1549 = vmatprep.subr.bf16.mxu0 0
    %1550 = vmatpush2.bf16.msra.mxu0 0
    %1551 = vmatprep.subr.bf16.mxu0 0
    %1552 = vmatpush2.bf16.msra.mxu0 0
    %1553 = vmatprep.mubr.bf16.mxu0 0
    %1554 = vmatmul.mubr.bf16.gmra.mxu0 %v1510
    %v1555 = vpop.f32.mrf.mxu0
    %v1556 = vadd.f32 0.0, %v1555
    %v1557 = vpop.f32.mrf.mxu0
    %v1558 = vpop.f32.mrf.mxu0
    %v1559 = vadd.f32 0.0, %v1558
    %v1560 = vpop.f32.mrf.mxu0
    %1561 = vmatprep.mubr.bf16.mxu0 0
    %1562 = vmatmul.mubr.bf16.gmra.mxu0 %v1513
    %v1563 = vpop.f32.mrf.mxu0
    %v1564 = vadd.f32 0.0, %v1563
    %v1565 = vpop.f32.mrf.mxu0
    %v1566 = vpop.f32.mrf.mxu0
    %v1567 = vadd.f32 0.0, %v1566
    %v1568 = vpop.f32.mrf.mxu0
    %1569 = vmatprep.mubr.bf16.mxu0 0
    %1570 = vmatmul.mubr.bf16.gmra.mxu0 %v1516
    %v1571 = vpop.f32.mrf.mxu0
    %v1572 = vadd.f32 0.0, %v1571
    %v1573 = vpop.f32.mrf.mxu0
    %v1574 = vpop.f32.mrf.mxu0
    %v1575 = vadd.f32 0.0, %v1574
    %v1576 = vpop.f32.mrf.mxu0
    %1577 = vmatprep.mubr.bf16.mxu0 0
    %1578 = vmatmul.mubr.bf16.gmra.mxu0 %v1519
    %v1579 = vpop.f32.mrf.mxu0
    %v1580 = vadd.f32 0.0, %v1579
    %v1581 = vpop.f32.mrf.mxu0
    %v1582 = vpop.f32.mrf.mxu0
    %v1583 = vadd.f32 0.0, %v1582
    %v1584 = vpop.f32.mrf.mxu0
    %1585 = vdwg.mxu0
    %v1586 = vlaneseq
    %v1587 = vshrl.u32 %v1586, 7
    %v1588 = vsub.s32 1, %v1587
    %v1589 = vrot.slane %v512, %v1588
    %v1590 = vmul.f32 %v1556, %v1589
    %v1591 = vmul.f32 %v1559, %v1589
    %v1592 = vmul.f32 %v1564, %v1589
    %v1593 = vmul.f32 %v1567, %v1589
    %v1594 = vmul.f32 %v1572, %v1589
    %v1595 = vmul.f32 %v1575, %v1589
    %v1596 = vmul.f32 %v1580, %v1589
    %v1597 = vmul.f32 %v1583, %v1589
    %v1598 = vadd.f32 %v1481, %v1590
    %v1599 = vadd.f32 %v1482, %v1591
    %v1600 = vadd.f32 %v1483, %v1592
    %v1601 = vadd.f32 %v1484, %v1593
    %v1602 = vadd.f32 %v1485, %v1594
    %v1603 = vadd.f32 %v1486, %v1595
    %v1604 = vadd.f32 %v1487, %v1596
    %v1605 = vadd.f32 %v1488, %v1597
    %v1606 = vadd.f32 %v1364, %v1598
    %v1607 = vadd.f32 %v1365, %v1599
    %v1608 = vadd.f32 %v1366, %v1600
    %v1609 = vadd.f32 %v1367, %v1601
    %v1610 = vadd.f32 %v1368, %v1602
    %v1611 = vadd.f32 %v1369, %v1603
    %v1612 = vadd.f32 %v1370, %v1604
    %v1613 = vadd.f32 %v1371, %v1605
    %v1614 = vpack.c.bf16 %v1607, %v1606
    %v1615 = vpack.c.bf16 %v1609, %v1608
    %v1616 = vpack.c.bf16 %v1611, %v1610
    %v1617 = vpack.c.bf16 %v1613, %v1612
    %v1619 = vlaneseq
    %v1620 = vshrl.u32 %v1619, 7
    %v1621 = vsub.s32 0, %v1620
    %v1622 = vrot.slane %v1039, %v1621
    %v1628 = vunpack.c.l.b16 %v1035
    %v1629 = vunpack.c.l.b16 %v1036
    %v1630 = vunpack.c.l.b16 %v1037
    %v1631 = vunpack.c.l.b16 %v1038
    %v1632 = vpack.c.b16 %v1629, %v1628
    %v1633 = vpack.c.b16 %v1631, %v1630
    %v1637 = vsel %vm160, %v1614, 0
    %v1640 = vsel %vm160, %v1615, 0
    %v1643 = vsel %vm160, %v1616, 0
    %v1646 = vsel %vm160, %v1617, 0
    %1648 = vmatprep.subr.bf16.mxu0 0
    %1649 = vmatpush1.bf16.msra.mxu0 0
    %1650 = vmatprep.subr.bf16.mxu0 0
    %1651 = vmatpush1.bf16.msra.mxu0 0
    %1652 = vmatprep.subr.bf16.mxu0 0
    %1653 = vmatpush1.bf16.msra.mxu0 0
    %1654 = vmatprep.subr.bf16.mxu0 0
    %1655 = vmatpush1.bf16.msra.mxu0 0
    %1656 = vmatprep.subr.bf16.mxu0 0
    %1657 = vmatpush1.bf16.msra.mxu0 0
    %1658 = vmatprep.subr.bf16.mxu0 0
    %1659 = vmatpush1.bf16.msra.mxu0 0
    %1660 = vmatprep.subr.bf16.mxu0 0
    %1661 = vmatpush1.bf16.msra.mxu0 %v1633
    %1662 = vmatprep.subr.bf16.mxu0 0
    %1663 = vmatpush1.bf16.msra.mxu0 %v1632
    %1664 = vmatprep.subr.bf16.mxu0 0
    %1665 = vmatpush2.bf16.msra.mxu0 0
    %1666 = vmatprep.subr.bf16.mxu0 0
    %1667 = vmatpush2.bf16.msra.mxu0 0
    %1668 = vmatprep.subr.bf16.mxu0 0
    %1669 = vmatpush2.bf16.msra.mxu0 0
    %1670 = vmatprep.subr.bf16.mxu0 0
    %1671 = vmatpush2.bf16.msra.mxu0 0
    %1672 = vmatprep.subr.bf16.mxu0 0
    %1673 = vmatpush2.bf16.msra.mxu0 0
    %1674 = vmatprep.subr.bf16.mxu0 0
    %1675 = vmatpush2.bf16.msra.mxu0 0
    %1676 = vmatprep.subr.bf16.mxu0 0
    %1677 = vmatpush2.bf16.msra.mxu0 0
    %1678 = vmatprep.subr.bf16.mxu0 0
    %1679 = vmatpush2.bf16.msra.mxu0 0
    %1680 = vmatprep.mubr.bf16.mxu0 0
    %1681 = vmatmul.mubr.bf16.gmra.mxu0 %v1637
    %v1682 = vpop.f32.mrf.mxu0
    %v1683 = vadd.f32 %v1622, %v1682
    %v1684 = vpop.f32.mrf.mxu0
    %v1685 = vpop.f32.mrf.mxu0
    %v1686 = vadd.f32 %v1622, %v1685
    %v1687 = vpop.f32.mrf.mxu0
    %1688 = vmatprep.mubr.bf16.mxu0 0
    %1689 = vmatmul.mubr.bf16.gmra.mxu0 %v1640
    %v1690 = vpop.f32.mrf.mxu0
    %v1691 = vadd.f32 %v1622, %v1690
    %v1692 = vpop.f32.mrf.mxu0
    %v1693 = vpop.f32.mrf.mxu0
    %v1694 = vadd.f32 %v1622, %v1693
    %v1695 = vpop.f32.mrf.mxu0
    %1696 = vmatprep.mubr.bf16.mxu0 0
    %1697 = vmatmul.mubr.bf16.gmra.mxu0 %v1643
    %v1698 = vpop.f32.mrf.mxu0
    %v1699 = vadd.f32 %v1622, %v1698
    %v1700 = vpop.f32.mrf.mxu0
    %v1701 = vpop.f32.mrf.mxu0
    %v1702 = vadd.f32 %v1622, %v1701
    %v1703 = vpop.f32.mrf.mxu0
    %1704 = vmatprep.mubr.bf16.mxu0 0
    %1705 = vmatmul.mubr.bf16.gmra.mxu0 %v1646
    %v1706 = vpop.f32.mrf.mxu0
    %v1707 = vadd.f32 %v1622, %v1706
    %v1708 = vpop.f32.mrf.mxu0
    %v1709 = vpop.f32.mrf.mxu0
    %v1710 = vadd.f32 %v1622, %v1709
    %v1711 = vpop.f32.mrf.mxu0
    %1712 = vdwg.mxu0
    %1713 = vst.msk [vmem:[%s9] sm:$0xff] %vm160, %v1683
    %1714 = vst.msk [vmem:[%s9 + $0x8] sm:$0xff] %vm160, %v1686
    %1715 = vst.msk [vmem:[%s9 + $0x10] sm:$0xff] %vm160, %v1691
    %1716 = vst.msk [vmem:[%s9 + $0x18] sm:$0xff] %vm160, %v1694
    %1717 = vst.msk [vmem:[%s9 + $0x20] sm:$0xff] %vm160, %v1699
    %1718 = vst.msk [vmem:[%s9 + $0x28] sm:$0xff] %vm160, %v1702
    %1719 = vst.msk [vmem:[%s9 + $0x30] sm:$0xff] %vm160, %v1707
    %1720 = vst.msk [vmem:[%s9 + $0x38] sm:$0xff] %vm160, %v1710
    %1721 = vxpose.xlu0.c.b16.start [1/8] %v1023, 128
    %1722 = vxpose.xlu0.c.b16.cont [2/8] %v1024, 128
    %1723 = vxpose.xlu0.c.b16.cont [3/8] %v1025, 128
    %1724 = vxpose.xlu0.c.b16.cont [4/8] %v1026, 128
    %1725 = vxpose.xlu0.c.b16.cont [5/8] 0, 128
    %1726 = vxpose.xlu0.c.b16.cont [6/8] 0, 128
    %1727 = vxpose.xlu0.c.b16.cont [7/8] 0, 128
    %1728 = vxpose.xlu0.c.b16.end [8/8] 0, 128
    %v1729 = vpop.trf.xlu0
    %v1730 = vpop.trf.xlu0
    %v1731 = vpop.trf.xlu0
    %v1732 = vpop.trf.xlu0
    %v1733 = vpop.trf.xlu0
    %v1734 = vpop.trf.xlu0
    %v1735 = vpop.trf.xlu0
    %v1736 = vpop.trf.xlu0
    %v1738 = vsel %vm1056, %v1729, 0
    %v1741 = vsel %vm1056, %v1730, 0
    %1743 = vmatprep.subr.bf16.mxu0 0
    %1744 = vmatpush1.bf16.msra.mxu0 0
    %1745 = vmatprep.subr.bf16.mxu0 0
    %1746 = vmatpush1.bf16.msra.mxu0 0
    %1747 = vmatprep.subr.bf16.mxu0 0
    %1748 = vmatpush1.bf16.msra.mxu0 0
    %1749 = vmatprep.subr.bf16.mxu0 0
    %1750 = vmatpush1.bf16.msra.mxu0 0
    %1751 = vmatprep.subr.bf16.mxu0 0
    %1752 = vmatpush1.bf16.msra.mxu0 %v1034
    %1753 = vmatprep.subr.bf16.mxu0 0
    %1754 = vmatpush1.bf16.msra.mxu0 %v1033
    %1755 = vmatprep.subr.bf16.mxu0 0
    %1756 = vmatpush1.bf16.msra.mxu0 %v1032
    %1757 = vmatprep.subr.bf16.mxu0 0
    %1758 = vmatpush1.bf16.msra.mxu0 %v1031
    %1759 = vmatprep.subr.bf16.mxu0 0
    %1760 = vmatpush2.bf16.msra.mxu0 0
    %1761 = vmatprep.subr.bf16.mxu0 0
    %1762 = vmatpush2.bf16.msra.mxu0 0
    %1763 = vmatprep.subr.bf16.mxu0 0
    %1764 = vmatpush2.bf16.msra.mxu0 0
    %1765 = vmatprep.subr.bf16.mxu0 0
    %1766 = vmatpush2.bf16.msra.mxu0 0
    %1767 = vmatprep.subr.bf16.mxu0 0
    %1768 = vmatpush2.bf16.msra.mxu0 0
    %1769 = vmatprep.subr.bf16.mxu0 0
    %1770 = vmatpush2.bf16.msra.mxu0 0
    %1771 = vmatprep.subr.bf16.mxu0 0
    %1772 = vmatpush2.bf16.msra.mxu0 0
    %1773 = vmatprep.subr.bf16.mxu0 0
    %1774 = vmatpush2.bf16.msra.mxu0 0
    %1775 = vmatprep.mubr.bf16.mxu0 0
    %1776 = vmatmul.mubr.bf16.gmra.mxu0 %v1738
    %v1777 = vpop.f32.mrf.mxu0
    %v1778 = vadd.f32 0.0, %v1777
    %v1779 = vpop.f32.mrf.mxu0
    %v1780 = vpop.f32.mrf.mxu0
    %v1781 = vadd.f32 0.0, %v1780
    %v1782 = vpop.f32.mrf.mxu0
    %1783 = vmatprep.mubr.bf16.mxu0 0
    %1784 = vmatmul.mubr.bf16.gmra.mxu0 %v1741
    %v1785 = vpop.f32.mrf.mxu0
    %v1786 = vadd.f32 0.0, %v1785
    %v1787 = vpop.f32.mrf.mxu0
    %v1788 = vpop.f32.mrf.mxu0
    %v1789 = vadd.f32 0.0, %v1788
    %v1790 = vpop.f32.mrf.mxu0
    %1791 = vdwg.mxu0
    %v1792 = vmul.f32 %v1778, %v508
    %v1793 = vmul.f32 %v1781, %v509
    %v1794 = vmul.f32 %v1786, %v510
    %v1795 = vmul.f32 %v1789, %v511
    %v1796 = vpack.c.bf16 %v1793, %v1792
    %v1797 = vpack.c.bf16 %v1795, %v1794
    %v1798 = vmul.f32 %v478, 0.5
    %v1799 = vmul.f32 %v481, 0.5
    %v1800 = vmul.f32 %v486, 0.5
    %v1801 = vmul.f32 %v489, 0.5
    %v1802 = vmul.f32 %v494, 0.5
    %v1803 = vmul.f32 %v497, 0.5
    %v1804 = vmul.f32 %v502, 0.5
    %v1805 = vmul.f32 %v505, 0.5
    %v1807 = vsel %vm160, %v1015, 0
    %v1810 = vsel %vm160, %v1016, 0
    %v1813 = vsel %vm160, %v1017, 0
    %v1816 = vsel %vm160, %v1018, 0
    %1818 = vmatprep.subr.bf16.mxu0 0
    %1819 = vmatpush1.bf16.msra.mxu0 0
    %1820 = vmatprep.subr.bf16.mxu0 0
    %1821 = vmatpush1.bf16.msra.mxu0 0
    %1822 = vmatprep.subr.bf16.mxu0 0
    %1823 = vmatpush1.bf16.msra.mxu0 0
    %1824 = vmatprep.subr.bf16.mxu0 0
    %1825 = vmatpush1.bf16.msra.mxu0 0
    %1826 = vmatprep.subr.bf16.mxu0 0
    %1827 = vmatpush1.bf16.msra.mxu0 0
    %1828 = vmatprep.subr.bf16.mxu0 0
    %1829 = vmatpush1.bf16.msra.mxu0 0
    %1830 = vmatprep.subr.bf16.mxu0 0
    %1831 = vmatpush1.bf16.msra.mxu0 %v1797
    %1832 = vmatprep.subr.bf16.mxu0 0
    %1833 = vmatpush1.bf16.msra.mxu0 %v1796
    %1834 = vmatprep.subr.bf16.mxu0 0
    %1835 = vmatpush2.bf16.msra.mxu0 0
    %1836 = vmatprep.subr.bf16.mxu0 0
    %1837 = vmatpush2.bf16.msra.mxu0 0
    %1838 = vmatprep.subr.bf16.mxu0 0
    %1839 = vmatpush2.bf16.msra.mxu0 0
    %1840 = vmatprep.subr.bf16.mxu0 0
    %1841 = vmatpush2.bf16.msra.mxu0 0
    %1842 = vmatprep.subr.bf16.mxu0 0
    %1843 = vmatpush2.bf16.msra.mxu0 0
    %1844 = vmatprep.subr.bf16.mxu0 0
    %1845 = vmatpush2.bf16.msra.mxu0 0
    %1846 = vmatprep.subr.bf16.mxu0 0
    %1847 = vmatpush2.bf16.msra.mxu0 0
    %1848 = vmatprep.subr.bf16.mxu0 0
    %1849 = vmatpush2.bf16.msra.mxu0 0
    %1850 = vmatprep.mubr.bf16.mxu0 0
    %1851 = vmatmul.mubr.bf16.gmra.mxu0 %v1807
    %v1852 = vpop.f32.mrf.mxu0
    %v1853 = vadd.f32 0.0, %v1852
    %v1854 = vpop.f32.mrf.mxu0
    %v1855 = vpop.f32.mrf.mxu0
    %v1856 = vadd.f32 0.0, %v1855
    %v1857 = vpop.f32.mrf.mxu0
    %1858 = vmatprep.mubr.bf16.mxu0 0
    %1859 = vmatmul.mubr.bf16.gmra.mxu0 %v1810
    %v1860 = vpop.f32.mrf.mxu0
    %v1861 = vadd.f32 0.0, %v1860
    %v1862 = vpop.f32.mrf.mxu0
    %v1863 = vpop.f32.mrf.mxu0
    %v1864 = vadd.f32 0.0, %v1863
    %v1865 = vpop.f32.mrf.mxu0
    %1866 = vmatprep.mubr.bf16.mxu0 0
    %1867 = vmatmul.mubr.bf16.gmra.mxu0 %v1813
    %v1868 = vpop.f32.mrf.mxu0
    %v1869 = vadd.f32 0.0, %v1868
    %v1870 = vpop.f32.mrf.mxu0
    %v1871 = vpop.f32.mrf.mxu0
    %v1872 = vadd.f32 0.0, %v1871
    %v1873 = vpop.f32.mrf.mxu0
    %1874 = vmatprep.mubr.bf16.mxu0 0
    %1875 = vmatmul.mubr.bf16.gmra.mxu0 %v1816
    %v1876 = vpop.f32.mrf.mxu0
    %v1877 = vadd.f32 0.0, %v1876
    %v1878 = vpop.f32.mrf.mxu0
    %v1879 = vpop.f32.mrf.mxu0
    %v1880 = vadd.f32 0.0, %v1879
    %v1881 = vpop.f32.mrf.mxu0
    %1882 = vdwg.mxu0
    %v1883 = vmul.f32 %v1853, 0.31830987
    %v1884 = vmul.f32 %v1856, 0.31830987
    %v1885 = vmul.f32 %v1861, 0.31830987
    %v1886 = vmul.f32 %v1864, 0.31830987
    %v1887 = vmul.f32 %v1869, 0.31830987
    %v1888 = vmul.f32 %v1872, 0.31830987
    %v1889 = vmul.f32 %v1877, 0.31830987
    %v1890 = vmul.f32 %v1880, 0.31830987
    %v1891 = vadd.f32 %v1798, %v1883
    %v1892 = vadd.f32 %v1799, %v1884
    %v1893 = vadd.f32 %v1800, %v1885
    %v1894 = vadd.f32 %v1801, %v1886
    %v1895 = vadd.f32 %v1802, %v1887
    %v1896 = vadd.f32 %v1803, %v1888
    %v1897 = vadd.f32 %v1804, %v1889
    %v1898 = vadd.f32 %v1805, %v1890
    %v1899 = vmul.f32 %v1891, %v1891
    %v1900 = vmul.f32 %v1892, %v1892
    %v1901 = vmul.f32 %v1893, %v1893
    %v1902 = vmul.f32 %v1894, %v1894
    %v1903 = vmul.f32 %v1895, %v1895
    %v1904 = vmul.f32 %v1896, %v1896
    %v1905 = vmul.f32 %v1897, %v1897
    %v1906 = vmul.f32 %v1898, %v1898
    %v1908 = vsel %vm160, %v1899, 0
    %v1911 = vsel %vm160, %v1900, 0
    %v1914 = vsel %vm160, %v1901, 0
    %v1917 = vsel %vm160, %v1902, 0
    %v1920 = vsel %vm160, %v1903, 0
    %v1923 = vsel %vm160, %v1904, 0
    %v1926 = vsel %vm160, %v1905, 0
    %v1929 = vsel %vm160, %v1906, 0
    %1931 = vmatprep.subr.mxu0 0.0
    %1932 = vmatpush1.msra.mxu0 0.0
    %1933 = vmatprep.subr.mxu0 0.0
    %1934 = vmatpush1.msra.mxu0 0.0
    %1935 = vmatprep.subr.mxu0 0.0
    %1936 = vmatpush1.msra.mxu0 0.0
    %1937 = vmatprep.subr.mxu0 0.0
    %1938 = vmatpush1.msra.mxu0 0.0
    %1939 = vmatprep.subr.mxu0 0.0
    %1940 = vmatpush1.msra.mxu0 0.0
    %1941 = vmatprep.subr.mxu0 0.0
    %1942 = vmatpush1.msra.mxu0 0.0
    %1943 = vmatprep.subr.mxu0 0.0
    %1944 = vmatpush1.msra.mxu0 0.0
    %1945 = vmatprep.subr.mxu0 0.0
    %1946 = vmatpush1.msra.mxu0 0.0
    %1947 = vmatprep.subr.mxu0 0.0
    %1948 = vmatpush1.msra.mxu0 0.0
    %1949 = vmatprep.subr.mxu0 0.0
    %1950 = vmatpush1.msra.mxu0 0.0
    %1951 = vmatprep.subr.mxu0 0.0
    %1952 = vmatpush1.msra.mxu0 0.0
    %1953 = vmatprep.subr.mxu0 0.0
    %1954 = vmatpush1.msra.mxu0 0.0
    %1955 = vmatprep.subr.mxu0 0.0
    %1956 = vmatpush1.msra.mxu0 %v511
    %1957 = vmatprep.subr.mxu0 0.0
    %1958 = vmatpush1.msra.mxu0 %v510
    %1959 = vmatprep.subr.mxu0 0.0
    %1960 = vmatpush1.msra.mxu0 %v509
    %1961 = vmatprep.subr.mxu0 0.0
    %1962 = vmatpush1.msra.mxu0 %v508
    %1963 = vmatprep.subr.mxu0 0.0
    %1964 = vmatpush2.msra.mxu0 0.0
    %1965 = vmatprep.subr.mxu0 0.0
    %1966 = vmatpush2.msra.mxu0 0.0
    %1967 = vmatprep.subr.mxu0 0.0
    %1968 = vmatpush2.msra.mxu0 0.0
    %1969 = vmatprep.subr.mxu0 0.0
    %1970 = vmatpush2.msra.mxu0 0.0
    %1971 = vmatprep.subr.mxu0 0.0
    %1972 = vmatpush2.msra.mxu0 0.0
    %1973 = vmatprep.subr.mxu0 0.0
    %1974 = vmatpush2.msra.mxu0 0.0
    %1975 = vmatprep.subr.mxu0 0.0
    %1976 = vmatpush2.msra.mxu0 0.0
    %1977 = vmatprep.subr.mxu0 0.0
    %1978 = vmatpush2.msra.mxu0 0.0
    %1979 = vmatprep.subr.mxu0 0.0
    %1980 = vmatpush2.msra.mxu0 0.0
    %1981 = vmatprep.subr.mxu0 0.0
    %1982 = vmatpush2.msra.mxu0 0.0
    %1983 = vmatprep.subr.mxu0 0.0
    %1984 = vmatpush2.msra.mxu0 0.0
    %1985 = vmatprep.subr.mxu0 0.0
    %1986 = vmatpush2.msra.mxu0 0.0
    %1987 = vmatprep.subr.mxu0 0.0
    %1988 = vmatpush2.msra.mxu0 0.0
    %1989 = vmatprep.subr.mxu0 0.0
    %1990 = vmatpush2.msra.mxu0 0.0
    %1991 = vmatprep.subr.mxu0 0.0
    %1992 = vmatpush2.msra.mxu0 0.0
    %1993 = vmatprep.subr.mxu0 0.0
    %1994 = vmatpush2.msra.mxu0 0.0
    %1995 = vmatprep.mubr.f32.mxu0 0.0
    %1996 = vmatmul.mubr.f32.gmra.mxu0 %v1908
    %v1997 = vpop.f32.mrf.mxu0
    %v1998 = vadd.f32 0.0, %v1997
    %v1999 = vpop.f32.mrf.mxu0
    %2000 = vmatprep.mubr.f32.mxu0 0.0
    %2001 = vmatmul.mubr.f32.gmra.mxu0 %v1911
    %v2002 = vpop.f32.mrf.mxu0
    %v2003 = vadd.f32 0.0, %v2002
    %v2004 = vpop.f32.mrf.mxu0
    %2005 = vmatprep.mubr.f32.mxu0 0.0
    %2006 = vmatmul.mubr.f32.gmra.mxu0 %v1914
    %v2007 = vpop.f32.mrf.mxu0
    %v2008 = vadd.f32 0.0, %v2007
    %v2009 = vpop.f32.mrf.mxu0
    %2010 = vmatprep.mubr.f32.mxu0 0.0
    %2011 = vmatmul.mubr.f32.gmra.mxu0 %v1917
    %v2012 = vpop.f32.mrf.mxu0
    %v2013 = vadd.f32 0.0, %v2012
    %v2014 = vpop.f32.mrf.mxu0
    %2015 = vmatprep.mubr.f32.mxu0 0.0
    %2016 = vmatmul.mubr.f32.gmra.mxu0 %v1920
    %v2017 = vpop.f32.mrf.mxu0
    %v2018 = vadd.f32 0.0, %v2017
    %v2019 = vpop.f32.mrf.mxu0
    %2020 = vmatprep.mubr.f32.mxu0 0.0
    %2021 = vmatmul.mubr.f32.gmra.mxu0 %v1923
    %v2022 = vpop.f32.mrf.mxu0
    %v2023 = vadd.f32 0.0, %v2022
    %v2024 = vpop.f32.mrf.mxu0
    %2025 = vmatprep.mubr.f32.mxu0 0.0
    %2026 = vmatmul.mubr.f32.gmra.mxu0 %v1926
    %v2027 = vpop.f32.mrf.mxu0
    %v2028 = vadd.f32 0.0, %v2027
    %v2029 = vpop.f32.mrf.mxu0
    %2030 = vmatprep.mubr.f32.mxu0 0.0
    %2031 = vmatmul.mubr.f32.gmra.mxu0 %v1929
    %v2032 = vpop.f32.mrf.mxu0
    %v2033 = vadd.f32 0.0, %v2032
    %v2034 = vpop.f32.mrf.mxu0
    %2035 = vdwg.mxu0
    %v2036 = vrsqrt.pop %v1998
    %v2037 = vrsqrt.pop %v2003
    %v2038 = vrsqrt.pop %v2008
    %v2039 = vrsqrt.pop %v2013
    %v2040 = vrsqrt.pop %v2018
    %v2041 = vrsqrt.pop %v2023
    %v2042 = vrsqrt.pop %v2028
    %v2043 = vrsqrt.pop %v2033
    %v2044 = vmul.f32 %v1891, %v2036
    %v2045 = vmul.f32 %v1892, %v2037
    %v2046 = vmul.f32 %v1893, %v2038
    %v2047 = vmul.f32 %v1894, %v2039
    %v2048 = vmul.f32 %v1895, %v2040
    %v2049 = vmul.f32 %v1896, %v2041
    %v2050 = vmul.f32 %v1897, %v2042
    %v2051 = vmul.f32 %v1898, %v2043
    %2052 = vmatprep.subr.bf16.mxu0 0
    %2053 = vmatpush1.bf16.msra.mxu0 0
    %2054 = vmatprep.subr.bf16.mxu0 0
    %2055 = vmatpush1.bf16.msra.mxu0 0
    %2056 = vmatprep.subr.bf16.mxu0 0
    %2057 = vmatpush1.bf16.msra.mxu0 0
    %2058 = vmatprep.subr.bf16.mxu0 0
    %2059 = vmatpush1.bf16.msra.mxu0 0
    %2060 = vmatprep.subr.bf16.mxu0 0
    %2061 = vmatpush1.bf16.msra.mxu0 %v1034
    %2062 = vmatprep.subr.bf16.mxu0 0
    %2063 = vmatpush1.bf16.msra.mxu0 %v1033
    %2064 = vmatprep.subr.bf16.mxu0 0
    %2065 = vmatpush1.bf16.msra.mxu0 %v1032
    %2066 = vmatprep.subr.bf16.mxu0 0
    %2067 = vmatpush1.bf16.msra.mxu0 %v1031
    %2068 = vmatprep.subr.bf16.mxu0 0
    %2069 = vmatpush2.bf16.msra.mxu0 0
    %2070 = vmatprep.subr.bf16.mxu0 0
    %2071 = vmatpush2.bf16.msra.mxu0 0
    %2072 = vmatprep.subr.bf16.mxu0 0
    %2073 = vmatpush2.bf16.msra.mxu0 0
    %2074 = vmatprep.subr.bf16.mxu0 0
    %2075 = vmatpush2.bf16.msra.mxu0 0
    %2076 = vmatprep.subr.bf16.mxu0 0
    %2077 = vmatpush2.bf16.msra.mxu0 0
    %2078 = vmatprep.subr.bf16.mxu0 0
    %2079 = vmatpush2.bf16.msra.mxu0 0
    %2080 = vmatprep.subr.bf16.mxu0 0
    %2081 = vmatpush2.bf16.msra.mxu0 0
    %2082 = vmatprep.subr.bf16.mxu0 0
    %2083 = vmatpush2.bf16.msra.mxu0 0
    %2084 = vmatprep.mubr.bf16.mxu0 0
    %2085 = vmatmul.mubr.bf16.gmra.mxu0 %v1393
    %v2086 = vpop.f32.mrf.mxu0
    %v2087 = vadd.f32 0.0, %v2086
    %v2088 = vpop.f32.mrf.mxu0
    %v2089 = vpop.f32.mrf.mxu0
    %v2090 = vadd.f32 0.0, %v2089
    %v2091 = vpop.f32.mrf.mxu0
    %2092 = vmatprep.mubr.bf16.mxu0 0
    %2093 = vmatmul.mubr.bf16.gmra.mxu0 %v1396
    %v2094 = vpop.f32.mrf.mxu0
    %v2095 = vadd.f32 0.0, %v2094
    %v2096 = vpop.f32.mrf.mxu0
    %v2097 = vpop.f32.mrf.mxu0
    %v2098 = vadd.f32 0.0, %v2097
    %v2099 = vpop.f32.mrf.mxu0
    %2100 = vmatprep.mubr.bf16.mxu0 0
    %2101 = vmatmul.mubr.bf16.gmra.mxu0 %v1399
    %v2102 = vpop.f32.mrf.mxu0
    %v2103 = vadd.f32 0.0, %v2102
    %v2104 = vpop.f32.mrf.mxu0
    %v2105 = vpop.f32.mrf.mxu0
    %v2106 = vadd.f32 0.0, %v2105
    %v2107 = vpop.f32.mrf.mxu0
    %2108 = vmatprep.mubr.bf16.mxu0 0
    %2109 = vmatmul.mubr.bf16.gmra.mxu0 %v1402
    %v2110 = vpop.f32.mrf.mxu0
    %v2111 = vadd.f32 0.0, %v2110
    %v2112 = vpop.f32.mrf.mxu0
    %v2113 = vpop.f32.mrf.mxu0
    %v2114 = vadd.f32 0.0, %v2113
    %v2115 = vpop.f32.mrf.mxu0
    %2116 = vdwg.mxu0
    %v2117 = vmul.f32 %v2087, %v1472
    %v2118 = vmul.f32 %v2090, %v1472
    %v2119 = vmul.f32 %v2095, %v1472
    %v2120 = vmul.f32 %v2098, %v1472
    %v2121 = vmul.f32 %v2103, %v1472
    %v2122 = vmul.f32 %v2106, %v1472
    %v2123 = vmul.f32 %v2111, %v1472
    %v2124 = vmul.f32 %v2114, %v1472
    %v2125 = vadd.f32 %v2117, 0.0
    %v2126 = vadd.f32 %v2118, 0.0
    %v2127 = vadd.f32 %v2119, 0.0
    %v2128 = vadd.f32 %v2120, 0.0
    %v2129 = vadd.f32 %v2121, 0.0
    %v2130 = vadd.f32 %v2122, 0.0
    %v2131 = vadd.f32 %v2123, 0.0
    %v2132 = vadd.f32 %v2124, 0.0
    %2133 = vmatprep.subr.bf16.mxu0 0
    %2134 = vmatpush1.bf16.msra.mxu0 0
    %2135 = vmatprep.subr.bf16.mxu0 0
    %2136 = vmatpush1.bf16.msra.mxu0 0
    %2137 = vmatprep.subr.bf16.mxu0 0
    %2138 = vmatpush1.bf16.msra.mxu0 0
    %2139 = vmatprep.subr.bf16.mxu0 0
    %2140 = vmatpush1.bf16.msra.mxu0 0
    %2141 = vmatprep.subr.bf16.mxu0 0
    %2142 = vmatpush1.bf16.msra.mxu0 %v1034
    %2143 = vmatprep.subr.bf16.mxu0 0
    %2144 = vmatpush1.bf16.msra.mxu0 %v1033
    %2145 = vmatprep.subr.bf16.mxu0 0
    %2146 = vmatpush1.bf16.msra.mxu0 %v1032
    %2147 = vmatprep.subr.bf16.mxu0 0
    %2148 = vmatpush1.bf16.msra.mxu0 %v1031
    %2149 = vmatprep.subr.bf16.mxu0 0
    %2150 = vmatpush2.bf16.msra.mxu0 0
    %2151 = vmatprep.subr.bf16.mxu0 0
    %2152 = vmatpush2.bf16.msra.mxu0 0
    %2153 = vmatprep.subr.bf16.mxu0 0
    %2154 = vmatpush2.bf16.msra.mxu0 0
    %2155 = vmatprep.subr.bf16.mxu0 0
    %2156 = vmatpush2.bf16.msra.mxu0 0
    %2157 = vmatprep.subr.bf16.mxu0 0
    %2158 = vmatpush2.bf16.msra.mxu0 0
    %2159 = vmatprep.subr.bf16.mxu0 0
    %2160 = vmatpush2.bf16.msra.mxu0 0
    %2161 = vmatprep.subr.bf16.mxu0 0
    %2162 = vmatpush2.bf16.msra.mxu0 0
    %2163 = vmatprep.subr.bf16.mxu0 0
    %2164 = vmatpush2.bf16.msra.mxu0 0
    %2165 = vmatprep.mubr.bf16.mxu0 0
    %2166 = vmatmul.mubr.bf16.gmra.mxu0 %v1510
    %v2167 = vpop.f32.mrf.mxu0
    %v2168 = vadd.f32 0.0, %v2167
    %v2169 = vpop.f32.mrf.mxu0
    %v2170 = vpop.f32.mrf.mxu0
    %v2171 = vadd.f32 0.0, %v2170
    %v2172 = vpop.f32.mrf.mxu0
    %2173 = vmatprep.mubr.bf16.mxu0 0
    %2174 = vmatmul.mubr.bf16.gmra.mxu0 %v1513
    %v2175 = vpop.f32.mrf.mxu0
    %v2176 = vadd.f32 0.0, %v2175
    %v2177 = vpop.f32.mrf.mxu0
    %v2178 = vpop.f32.mrf.mxu0
    %v2179 = vadd.f32 0.0, %v2178
    %v2180 = vpop.f32.mrf.mxu0
    %2181 = vmatprep.mubr.bf16.mxu0 0
    %2182 = vmatmul.mubr.bf16.gmra.mxu0 %v1516
    %v2183 = vpop.f32.mrf.mxu0
    %v2184 = vadd.f32 0.0, %v2183
    %v2185 = vpop.f32.mrf.mxu0
    %v2186 = vpop.f32.mrf.mxu0
    %v2187 = vadd.f32 0.0, %v2186
    %v2188 = vpop.f32.mrf.mxu0
    %2189 = vmatprep.mubr.bf16.mxu0 0
    %2190 = vmatmul.mubr.bf16.gmra.mxu0 %v1519
    %v2191 = vpop.f32.mrf.mxu0
    %v2192 = vadd.f32 0.0, %v2191
    %v2193 = vpop.f32.mrf.mxu0
    %v2194 = vpop.f32.mrf.mxu0
    %v2195 = vadd.f32 0.0, %v2194
    %v2196 = vpop.f32.mrf.mxu0
    %2197 = vdwg.mxu0
    %v2198 = vmul.f32 %v2168, %v1589
    %v2199 = vmul.f32 %v2171, %v1589
    %v2200 = vmul.f32 %v2176, %v1589
    %v2201 = vmul.f32 %v2179, %v1589
    %v2202 = vmul.f32 %v2184, %v1589
    %v2203 = vmul.f32 %v2187, %v1589
    %v2204 = vmul.f32 %v2192, %v1589
    %v2205 = vmul.f32 %v2195, %v1589
    %v2206 = vadd.f32 %v2125, %v2198
    %v2207 = vadd.f32 %v2126, %v2199
    %v2208 = vadd.f32 %v2127, %v2200
    %v2209 = vadd.f32 %v2128, %v2201
    %v2210 = vadd.f32 %v2129, %v2202
    %v2211 = vadd.f32 %v2130, %v2203
    %v2212 = vadd.f32 %v2131, %v2204
    %v2213 = vadd.f32 %v2132, %v2205
    %v2214 = vadd.f32 %v2044, %v2206
    %v2215 = vadd.f32 %v2045, %v2207
    %v2216 = vadd.f32 %v2046, %v2208
    %v2217 = vadd.f32 %v2047, %v2209
    %v2218 = vadd.f32 %v2048, %v2210
    %v2219 = vadd.f32 %v2049, %v2211
    %v2220 = vadd.f32 %v2050, %v2212
    %v2221 = vadd.f32 %v2051, %v2213
    %v2222 = vpack.c.bf16 %v2215, %v2214
    %v2223 = vpack.c.bf16 %v2217, %v2216
    %v2224 = vpack.c.bf16 %v2219, %v2218
    %v2225 = vpack.c.bf16 %v2221, %v2220
    %v2227 = vsel %vm160, %v2222, 0
    %v2230 = vsel %vm160, %v2223, 0
    %v2233 = vsel %vm160, %v2224, 0
    %v2236 = vsel %vm160, %v2225, 0
    %2238 = vmatprep.subr.bf16.mxu0 0
    %2239 = vmatpush1.bf16.msra.mxu0 0
    %2240 = vmatprep.subr.bf16.mxu0 0
    %2241 = vmatpush1.bf16.msra.mxu0 0
    %2242 = vmatprep.subr.bf16.mxu0 0
    %2243 = vmatpush1.bf16.msra.mxu0 0
    %2244 = vmatprep.subr.bf16.mxu0 0
    %2245 = vmatpush1.bf16.msra.mxu0 0
    %2246 = vmatprep.subr.bf16.mxu0 0
    %2247 = vmatpush1.bf16.msra.mxu0 0
    %2248 = vmatprep.subr.bf16.mxu0 0
    %2249 = vmatpush1.bf16.msra.mxu0 0
    %2250 = vmatprep.subr.bf16.mxu0 0
    %2251 = vmatpush1.bf16.msra.mxu0 %v1633
    %2252 = vmatprep.subr.bf16.mxu0 0
    %2253 = vmatpush1.bf16.msra.mxu0 %v1632
    %2254 = vmatprep.subr.bf16.mxu0 0
    %2255 = vmatpush2.bf16.msra.mxu0 0
    %2256 = vmatprep.subr.bf16.mxu0 0
    %2257 = vmatpush2.bf16.msra.mxu0 0
    %2258 = vmatprep.subr.bf16.mxu0 0
    %2259 = vmatpush2.bf16.msra.mxu0 0
    %2260 = vmatprep.subr.bf16.mxu0 0
    %2261 = vmatpush2.bf16.msra.mxu0 0
    %2262 = vmatprep.subr.bf16.mxu0 0
    %2263 = vmatpush2.bf16.msra.mxu0 0
    %2264 = vmatprep.subr.bf16.mxu0 0
    %2265 = vmatpush2.bf16.msra.mxu0 0
    %2266 = vmatprep.subr.bf16.mxu0 0
    %2267 = vmatpush2.bf16.msra.mxu0 0
    %2268 = vmatprep.subr.bf16.mxu0 0
    %2269 = vmatpush2.bf16.msra.mxu0 0
    %2270 = vmatprep.mubr.bf16.mxu0 0
    %2271 = vmatmul.mubr.bf16.gmra.mxu0 %v2227
    %v2272 = vpop.f32.mrf.mxu0
    %v2273 = vadd.f32 %v1622, %v2272
    %v2274 = vpop.f32.mrf.mxu0
    %v2275 = vpop.f32.mrf.mxu0
    %v2276 = vadd.f32 %v1622, %v2275
    %v2277 = vpop.f32.mrf.mxu0
    %2278 = vmatprep.mubr.bf16.mxu0 0
    %2279 = vmatmul.mubr.bf16.gmra.mxu0 %v2230
    %v2280 = vpop.f32.mrf.mxu0
    %v2281 = vadd.f32 %v1622, %v2280
    %v2282 = vpop.f32.mrf.mxu0
    %v2283 = vpop.f32.mrf.mxu0
    %v2284 = vadd.f32 %v1622, %v2283
    %v2285 = vpop.f32.mrf.mxu0
    %2286 = vmatprep.mubr.bf16.mxu0 0
    %2287 = vmatmul.mubr.bf16.gmra.mxu0 %v2233
    %v2288 = vpop.f32.mrf.mxu0
    %v2289 = vadd.f32 %v1622, %v2288
    %v2290 = vpop.f32.mrf.mxu0
    %v2291 = vpop.f32.mrf.mxu0
    %v2292 = vadd.f32 %v1622, %v2291
    %v2293 = vpop.f32.mrf.mxu0
    %2294 = vmatprep.mubr.bf16.mxu0 0
    %2295 = vmatmul.mubr.bf16.gmra.mxu0 %v2236
    %v2296 = vpop.f32.mrf.mxu0
    %v2297 = vadd.f32 %v1622, %v2296
    %v2298 = vpop.f32.mrf.mxu0
    %v2299 = vpop.f32.mrf.mxu0
    %v2300 = vadd.f32 %v1622, %v2299
    %v2301 = vpop.f32.mrf.mxu0
    %2302 = vdwg.mxu0
    %2303 = vst.msk [vmem:[%s9 + $0x40] sm:$0xff] %vm160, %v2273
    %2304 = vst.msk [vmem:[%s9 + $0x48] sm:$0xff] %vm160, %v2276
    %2305 = vst.msk [vmem:[%s9 + $0x50] sm:$0xff] %vm160, %v2281
    %2306 = vst.msk [vmem:[%s9 + $0x58] sm:$0xff] %vm160, %v2284
    %2307 = vst.msk [vmem:[%s9 + $0x60] sm:$0xff] %vm160, %v2289
    %2308 = vst.msk [vmem:[%s9 + $0x68] sm:$0xff] %vm160, %v2292
    %2309 = vst.msk [vmem:[%s9 + $0x70] sm:$0xff] %vm160, %v2297
    %2310 = vst.msk [vmem:[%s9 + $0x78] sm:$0xff] %vm160, %v2300
    // Predicated region
    $region54: #{tpu_custom_call.1} parent=1 // pred_check
      _
    $region55: #{tpu_custom_call.1} parent=1 // pred_check_branch
      %2312 = sbr.rel (0) target = $region57
    $region56: #{tpu_custom_call.1} parent=1 // pred_region
      _
    $region57: #{tpu_custom_call.1} parent=1 // pred_fallthru
      _
    // Predicated region
    $region58: #{tpu_custom_call.1} parent=1 // pred_check
      _
    $region59: #{tpu_custom_call.1} parent=1 // pred_check_branch
      %2314 = sbr.rel (0) target = $region61
    $region60: #{tpu_custom_call.1} parent=1 // pred_region
      _
    $region61: #{tpu_custom_call.1} parent=1 // pred_fallthru
      _
    %2315 = vsyncpa [#allocation3], 1
    %2316 = vsyncpa [#allocation5], 1
    %2317 = vsyncpa [#allocation8], 1

</llo_original>
